<compile_context>
chip_gen: v7x
topology: tpu7x:2x2x1
jax: 0.10.0
libtpu: 0.0.40
codegen_flags: <defaults>
</compile_context>

<pallas_src>
import math
from functools import partial

import jax
import jax.numpy as jnp
import numpy as np
from jax import lax
from jax.experimental import pallas as pl
from jax.experimental.pallas import tpu as pltpu

EMBEDDING_DIM = 16
H_DIM = 64              # Encoder(h_dim=64) default
H_PAD = 128             # hidden padded to one full lane dimension
MLP_DIM = 32            # unused in forward
NUM_LAYERS = 1
LEAKY_SLOPE = 0.01      # nn.LeakyReLU default negative_slope
# TODO(synk): DROPOUT is a no-op for a single-layer nn.LSTM and is not implemented.

# Batch tile (multiple of 8).  256 keeps the xg scratch (T*Bt*4*Hp*4B ~= 4 MiB)
# plus pipeline buffers inside the default scoped-VMEM budget on all chips
# (16 MiB v5e / 32 MiB v6e,v7x).  On v6e (128 MiB physical) this can be raised
# to 2048-4096 together with pltpu.CompilerParams(vmem_limit_bytes=...);
# keep <= 1024 on v7x (64 MiB per TensorCore).
BATCH_TILE = 256


def encoder_kernel(x_ref,                 # (1, T*Bt, 3)  f32, time-major within the tile
                   w1_ref, b1_ref,        # (3, 2E), (1, 2E)       f32
                   w2_ref, b2_ref,        # (2E, E), (1, E)        f32
                   wih_ref, bias_ref,     # (E, 4*Hp), (1, 4*Hp)   f32, gates [i|f|o|g], Hp lanes each
                   whh_ref,               # (Hp, 4*Hp)             f32
                   h_out_ref,             # (Bt, Hp)               f32
                   xg_ref,                # VMEM scratch (T*Bt, 4*Hp) f32
                   *, seq_len):
    Bt, Hp = h_out_ref.shape

    # ---------------- hoisted, non-recurrent math (all timesteps at once) ----------------
    x = x_ref[0]                                            # (T*Bt, 3)
    w1 = w1_ref[...]                                        # (3, 2E)
    # Linear(3, 2E) as three VPU broadcast-FMAs (a K=3 MXU matmul is wasted work).
    e = (x[:, 0:1] * w1[0:1, :]
         + x[:, 1:2] * w1[1:2, :]
         + x[:, 2:3] * w1[2:3, :]
         + b1_ref[...])
    e = jnp.where(e > 0, e, LEAKY_SLOPE * e)                # LeakyReLU
    e = jnp.dot(e, w2_ref[...], preferred_element_type=jnp.float32) + b2_ref[...]

    # Input-gate projection for all timesteps with the combined LSTM bias folded
    # in; staged in VMEM scratch so the recurrence re-loads one (Bt, 4Hp) slab
    # per step instead of keeping T of them live in vregs.
    xg_ref[...] = jnp.dot(e, wih_ref[...],
                          preferred_element_type=jnp.float32) + bias_ref[...]

    h = jnp.zeros((Bt, Hp), jnp.float32)
    c = jnp.zeros((Bt, Hp), jnp.float32)

    # ---------------- recurrence: statically unrolled (seq_len small & static) ----------------
    # Only the (Bt,Hp)@(Hp,4Hp) matmul + nonlinearities remain on the serial path.
    # Pad lanes stay exactly zero: gates_pad = 0 -> i/f/o_pad = 0.5, g_pad = 0,
    # so c_pad = 0 and h_pad = 0 every step.
    # TODO(synk): hold whh in the MXU weight registers across the unrolled steps
    # via pltpu.matmul_push_rhs / matmul_acc_lhs / matmul_pop to avoid re-pushing
    # the same RHS each step.
    for t in range(seq_len):
        gates = xg_ref[pl.ds(t * Bt, Bt), :] + jnp.dot(
            h, whh_ref[...], preferred_element_type=jnp.float32)       # (Bt, 4*Hp)
        sig = jax.nn.sigmoid(gates[:, :3 * Hp])    # i|f|o : lane-aligned, one EUP pass
        g = jnp.tanh(gates[:, 3 * Hp:])            # g gate: one EUP pass
        i = sig[:, 0 * Hp:1 * Hp]
        f = sig[:, 1 * Hp:2 * Hp]
        o = sig[:, 2 * Hp:3 * Hp]
        c = f * c + i * g
        h = o * jnp.tanh(c)

    h_out_ref[...] = h


def encoder_forward(obs_traj, obs_ped_speed, params):
    """Mirrors Encoder.forward: returns final_h of shape (num_layers, B, h_dim)."""
    x = jnp.concatenate([obs_traj, obs_ped_speed], axis=2).astype(jnp.float32)  # (T, B, 3)
    T, B, F = x.shape
    E = params["w2"].shape[1]
    H = params["w_hh"].shape[0]
    Hp = H_PAD
    assert H <= Hp

    # Batch tiling: pad B to a multiple of 8, choose a tile, pad to whole tiles.
    B8 = max(8, ((B + 7) // 8) * 8)
    Bt = min(BATCH_TILE, B8)
    Bp = ((B8 + Bt - 1) // Bt) * Bt
    nb = Bp // Bt
    if Bp != B:
        x = jnp.pad(x, ((0, 0), (0, Bp - B), (0, 0)))

    # Per-batch-tile contiguous, time-major-within-tile layout: (nb, T*Bt, 3).
    # (Keeping the batch axis explicit here avoids the silent interleaving bug of
    # flattening (T, Bp, 3) time-major and then tiling the flat axis.)
    x_tiles = x.reshape(T, nb, Bt, F).transpose(1, 0, 2, 3).reshape(nb, T * Bt, F)

    # PyTorch LSTM gate order along 4H is [i, f, g, o]; re-lay it out as
    # [i | f | o | g] with each gate padded to its own Hp=128-lane slot
    # (zero weights / bias in the pad lanes) so per-step gate slices are
    # full, lane-aligned vregs.
    def pad_gates(m):
        i, f, g, o = jnp.split(m, 4, axis=-1)
        padc = lambda v: jnp.pad(v, [(0, 0)] * (v.ndim - 1) + [(0, Hp - H)])
        return jnp.concatenate([padc(i), padc(f), padc(o), padc(g)], axis=-1)

    wih = pad_gates(params["w_ih"])                                    # (E, 4*Hp)
    whh = jnp.pad(pad_gates(params["w_hh"]), ((0, Hp - H), (0, 0)))    # (Hp, 4*Hp)
    bias = pad_gates(params["b_ih"] + params["b_hh"])                  # (1, 4*Hp)

    grid_spec = pltpu.PrefetchScalarGridSpec(
        num_scalar_prefetch=0,
        grid=(nb,),
        in_specs=[
            pl.BlockSpec((1, T * Bt, F), lambda b: (b, 0, 0)),   # x batch tile
            pl.BlockSpec((F, 2 * E), lambda b: (0, 0)),          # w1
            pl.BlockSpec((1, 2 * E), lambda b: (0, 0)),          # b1
            pl.BlockSpec((2 * E, E), lambda b: (0, 0)),          # w2
            pl.BlockSpec((1, E), lambda b: (0, 0)),              # b2
            pl.BlockSpec((E, 4 * Hp), lambda b: (0, 0)),         # w_ih (gate-padded)
            pl.BlockSpec((1, 4 * Hp), lambda b: (0, 0)),         # b_ih + b_hh (gate-padded)
            pl.BlockSpec((Hp, 4 * Hp), lambda b: (0, 0)),        # w_hh (gate- & row-padded)
        ],
        out_specs=pl.BlockSpec((Bt, Hp), lambda b: (b, 0)),
        scratch_shapes=[pltpu.VMEM((T * Bt, 4 * Hp), jnp.float32)],
    )

    h_final = pl.pallas_call(
        partial(encoder_kernel, seq_len=T),
        out_shape=jax.ShapeDtypeStruct((Bp, Hp), jnp.float32),
        grid_spec=grid_spec,
        compiler_params=pltpu.CompilerParams(
            dimension_semantics=("parallel",)),
    )(x_tiles,
      params["w1"], params["b1"],
      params["w2"], params["b2"],
      wih, bias, whh)

    # Drop batch padding and the hidden-lane padding; add the num_layers axis.
    return h_final[None, :B, :H]           # (num_layers=1, B, H) == final_h


def init_params(key):
    """Deterministic PyTorch-style uniform(-1/sqrt(fan), 1/sqrt(fan)) init."""
    E, H = EMBEDDING_DIM, H_DIM
    ks = jax.random.split(key, 8)

    def u(k, shape, fan):
        bound = 1.0 / math.sqrt(fan)
        return jax.random.uniform(k, shape, jnp.float32, -bound, bound)

    return dict(
        w1=u(ks[0], (3, 2 * E), 3),      b1=u(ks[1], (1, 2 * E), 3),
        w2=u(ks[2], (2 * E, E), 2 * E),  b2=u(ks[3], (1, E), 2 * E),
        w_ih=u(ks[4], (E, 4 * H), H),    b_ih=u(ks[5], (1, 4 * H), H),
        w_hh=u(ks[6], (H, 4 * H), H),    b_hh=u(ks[7], (1, 4 * H), H),
    )


def reference_forward(obs_traj, obs_ped_speed, p):
    """Pure-JAX f32 reference of the same math (for a sanity check)."""
    x = jnp.concatenate([obs_traj, obs_ped_speed], axis=2).astype(jnp.float32)
    T, B, _ = x.shape
    H = p["w_hh"].shape[0]
    e = x.reshape(-1, 3) @ p["w1"] + p["b1"]
    e = jnp.where(e > 0, e, LEAKY_SLOPE * e)
    e = (e @ p["w2"] + p["b2"]).reshape(T, B, -1)

    def step(carry, e_t):
        h, c = carry
        g = e_t @ p["w_ih"] + h @ p["w_hh"] + p["b_ih"] + p["b_hh"]
        i, f, gg, o = jnp.split(g, 4, axis=-1)
        c = jax.nn.sigmoid(f) * c + jax.nn.sigmoid(i) * jnp.tanh(gg)
        h = jax.nn.sigmoid(o) * jnp.tanh(c)
        return (h, c), None

    (h, _), _ = lax.scan(step, (jnp.zeros((B, H)), jnp.zeros((B, H))), e)
    return h[None]                         # (1, B, H)


if __name__ == "__main__":
    T, B = 8, 2  # seq_len=8, batch=2 pedestrians
    key = jax.random.PRNGKey(0)
    k_traj, k_speed, k_params = jax.random.split(key, 3)

    obs_traj = jax.random.normal(k_traj, (T, B, 2), jnp.float32)        # (T, B, 2)
    obs_ped_speed = jax.random.normal(k_speed, (T, B, 1), jnp.float32)  # (T, B, 1)
    params = init_params(k_params)

    final_h = encoder_forward(obs_traj, obs_ped_speed, params)
    final_h = jax.block_until_ready(final_h)
    assert final_h.shape == (NUM_LAYERS, B, H_DIM) and final_h.dtype == jnp.float32

    ref = reference_forward(obs_traj, obs_ped_speed, params)
    np.testing.assert_allclose(np.asarray(final_h), np.asarray(ref), rtol=1e-2, atol=1e-2)

    print("KERNEL_OK")
</pallas_src>

<mosaic_0001>
module attributes {stable_mosaic.version = 11 : i64} {
  func.func @encoder_kernel(%arg0: i32, %arg1: memref<1x64x3xf32, #tpu.memory_space<vmem>>, %arg2: memref<3x32xf32, #tpu.memory_space<vmem>>, %arg3: memref<1x32xf32, #tpu.memory_space<vmem>>, %arg4: memref<32x16xf32, #tpu.memory_space<vmem>>, %arg5: memref<1x16xf32, #tpu.memory_space<vmem>>, %arg6: memref<16x512xf32, #tpu.memory_space<vmem>>, %arg7: memref<1x512xf32, #tpu.memory_space<vmem>>, %arg8: memref<128x512xf32, #tpu.memory_space<vmem>>, %arg9: memref<8x128xf32, #tpu.memory_space<vmem>>, %arg10: memref<64x512xf32, #tpu.memory_space<vmem>>) attributes {dimension_semantics = [#tpu.dimension_semantics<parallel>], iteration_bounds = array<i64: 1>, scalar_prefetch = 0 : i64, scratch_operands = 1 : i64, tpu.core_type = #tpu.core_type<tc>, window_params = [{transform_indices = @transform_0, window_bounds = array<i64: 1, 64, 3>}, {pipeline_mode = #tpu.pipeline_mode<synchronous>, transform_indices = @transform_1, window_bounds = array<i64: 3, 32>}, {pipeline_mode = #tpu.pipeline_mode<synchronous>, transform_indices = @transform_2, window_bounds = array<i64: 1, 32>}, {pipeline_mode = #tpu.pipeline_mode<synchronous>, transform_indices = @transform_3, window_bounds = array<i64: 32, 16>}, {pipeline_mode = #tpu.pipeline_mode<synchronous>, transform_indices = @transform_4, window_bounds = array<i64: 1, 16>}, {pipeline_mode = #tpu.pipeline_mode<synchronous>, transform_indices = @transform_5, window_bounds = array<i64: 16, 512>}, {pipeline_mode = #tpu.pipeline_mode<synchronous>, transform_indices = @transform_6, window_bounds = array<i64: 1, 512>}, {pipeline_mode = #tpu.pipeline_mode<synchronous>, transform_indices = @transform_7, window_bounds = array<i64: 128, 512>}, {transform_indices = @transform_8, window_bounds = array<i64: 8, 128>}]} {
    %c0 = arith.constant 0 : index
    %c0_0 = arith.constant 0 : index
    %c0_1 = arith.constant 0 : index
    %0 = vector.load %arg1[%c0, %c0_0, %c0_1] : memref<1x64x3xf32, #tpu.memory_space<vmem>>, vector<1x64x3xf32>
    %1 = vector.shape_cast %0 : vector<1x64x3xf32> to vector<64x3xf32>
    %c0_2 = arith.constant 0 : index
    %c0_3 = arith.constant 0 : index
    %2 = vector.load %arg2[%c0_2, %c0_3] : memref<3x32xf32, #tpu.memory_space<vmem>>, vector<3x32xf32>
    %3 = vector.extract_strided_slice %1 {offsets = [0, 0], sizes = [64, 1], strides = [1, 1]} : vector<64x3xf32> to vector<64x1xf32>
    %4 = vector.extract_strided_slice %2 {offsets = [0, 0], sizes = [1, 32], strides = [1, 1]} : vector<3x32xf32> to vector<1x32xf32>
    %5 = vector.broadcast %3 : vector<64x1xf32> to vector<64x32xf32>
    %6 = vector.broadcast %4 : vector<1x32xf32> to vector<64x32xf32>
    %7 = arith.mulf %5, %6 : vector<64x32xf32>
    %8 = vector.extract_strided_slice %1 {offsets = [0, 1], sizes = [64, 1], strides = [1, 1]} : vector<64x3xf32> to vector<64x1xf32>
    %9 = vector.extract_strided_slice %2 {offsets = [1, 0], sizes = [1, 32], strides = [1, 1]} : vector<3x32xf32> to vector<1x32xf32>
    %10 = vector.broadcast %8 : vector<64x1xf32> to vector<64x32xf32>
    %11 = vector.broadcast %9 : vector<1x32xf32> to vector<64x32xf32>
    %12 = arith.mulf %10, %11 : vector<64x32xf32>
    %13 = arith.addf %7, %12 : vector<64x32xf32>
    %14 = vector.extract_strided_slice %1 {offsets = [0, 2], sizes = [64, 1], strides = [1, 1]} : vector<64x3xf32> to vector<64x1xf32>
    %15 = vector.extract_strided_slice %2 {offsets = [2, 0], sizes = [1, 32], strides = [1, 1]} : vector<3x32xf32> to vector<1x32xf32>
    %16 = vector.broadcast %14 : vector<64x1xf32> to vector<64x32xf32>
    %17 = vector.broadcast %15 : vector<1x32xf32> to vector<64x32xf32>
    %18 = arith.mulf %16, %17 : vector<64x32xf32>
    %19 = arith.addf %13, %18 : vector<64x32xf32>
    %c0_4 = arith.constant 0 : index
    %c0_5 = arith.constant 0 : index
    %20 = vector.load %arg3[%c0_4, %c0_5] : memref<1x32xf32, #tpu.memory_space<vmem>>, vector<1x32xf32>
    %21 = vector.broadcast %20 : vector<1x32xf32> to vector<64x32xf32>
    %22 = arith.addf %19, %21 : vector<64x32xf32>
    %cst = arith.constant 0.000000e+00 : f32
    %23 = vector.broadcast %cst : f32 to vector<64x32xf32>
    %24 = arith.cmpf ogt, %22, %23 : vector<64x32xf32>
    %cst_6 = arith.constant 0.00999999977 : f32
    %25 = vector.broadcast %cst_6 : f32 to vector<64x32xf32>
    %26 = arith.mulf %25, %22 : vector<64x32xf32>
    %27 = arith.select %24, %22, %26 : vector<64x32xi1>, vector<64x32xf32>
    %c0_7 = arith.constant 0 : index
    %c0_8 = arith.constant 0 : index
    %28 = vector.load %arg4[%c0_7, %c0_8] : memref<32x16xf32, #tpu.memory_space<vmem>>, vector<32x16xf32>
    %cst_9 = arith.constant dense<0.000000e+00> : vector<64x16xf32>
    %29 = tpu.matmul %27, %28, %cst_9 {dimension_numbers = #tpu.dot_dimension_numbers<[1], [0], [0], [1], [0, 0, 1, 1], [], []>} : vector<64x32xf32>, vector<32x16xf32>, vector<64x16xf32> -> vector<64x16xf32>
    %c0_10 = arith.constant 0 : index
    %c0_11 = arith.constant 0 : index
    %30 = vector.load %arg5[%c0_10, %c0_11] : memref<1x16xf32, #tpu.memory_space<vmem>>, vector<1x16xf32>
    %31 = vector.broadcast %30 : vector<1x16xf32> to vector<64x16xf32>
    %32 = arith.addf %29, %31 : vector<64x16xf32>
    %c0_12 = arith.constant 0 : index
    %c0_13 = arith.constant 0 : index
    %33 = vector.load %arg6[%c0_12, %c0_13] : memref<16x512xf32, #tpu.memory_space<vmem>>, vector<16x512xf32>
    %cst_14 = arith.constant dense<0.000000e+00> : vector<64x512xf32>
    %34 = tpu.matmul %32, %33, %cst_14 {dimension_numbers = #tpu.dot_dimension_numbers<[1], [0], [0], [1], [0, 0, 1, 1], [], []>} : vector<64x16xf32>, vector<16x512xf32>, vector<64x512xf32> -> vector<64x512xf32>
    %c0_15 = arith.constant 0 : index
    %c0_16 = arith.constant 0 : index
    %35 = vector.load %arg7[%c0_15, %c0_16] : memref<1x512xf32, #tpu.memory_space<vmem>>, vector<1x512xf32>
    %36 = vector.broadcast %35 : vector<1x512xf32> to vector<64x512xf32>
    %37 = arith.addf %34, %36 : vector<64x512xf32>
    %c0_17 = arith.constant 0 : index
    %c0_18 = arith.constant 0 : index
    %38 = vector.load %arg10[%c0_17, %c0_18] : memref<64x512xf32, #tpu.memory_space<vmem>>, vector<64x512xf32>
    tpu.vector_store %arg10[%c0_17, %c0_18], %37 {strides = array<i32>} : memref<64x512xf32, #tpu.memory_space<vmem>>, vector<64x512xf32>,
    %cst_19 = arith.constant 0.000000e+00 : f32
    %39 = vector.broadcast %cst_19 : f32 to vector<8x128xf32>
    %cst_20 = arith.constant 0.000000e+00 : f32
    %40 = vector.broadcast %cst_20 : f32 to vector<8x128xf32>
    %c0_21 = arith.constant 0 : index
    %c0_22 = arith.constant 0 : index
    %41 = vector.load %arg10[%c0_21, %c0_22] : memref<64x512xf32, #tpu.memory_space<vmem>>, vector<8x512xf32>
    %c0_23 = arith.constant 0 : index
    %c0_24 = arith.constant 0 : index
    %42 = vector.load %arg8[%c0_23, %c0_24] : memref<128x512xf32, #tpu.memory_space<vmem>>, vector<128x512xf32>
    %cst_25 = arith.constant dense<0.000000e+00> : vector<8x512xf32>
    %43 = tpu.matmul %39, %42, %cst_25 {dimension_numbers = #tpu.dot_dimension_numbers<[1], [0], [0], [1], [0, 0, 1, 1], [], []>} : vector<8x128xf32>, vector<128x512xf32>, vector<8x512xf32> -> vector<8x512xf32>
    %44 = arith.addf %41, %43 : vector<8x512xf32>
    %45 = vector.extract_strided_slice %44 {offsets = [0, 0], sizes = [8, 384], strides = [1, 1]} : vector<8x512xf32> to vector<8x384xf32>
    %46 = arith.negf %45 : vector<8x384xf32>
    %47 = math.exp %46 : vector<8x384xf32>
    %cst_26 = arith.constant 1.000000e+00 : f32
    %48 = vector.broadcast %cst_26 : f32 to vector<8x384xf32>
    %49 = arith.addf %48, %47 : vector<8x384xf32>
    %50 = arith.divf %48, %49 : vector<8x384xf32>
    %51 = vector.extract_strided_slice %44 {offsets = [0, 384], sizes = [8, 128], strides = [1, 1]} : vector<8x512xf32> to vector<8x128xf32>
    %52 = math.tanh %51 : vector<8x128xf32>
    %53 = vector.extract_strided_slice %50 {offsets = [0, 0], sizes = [8, 128], strides = [1, 1]} : vector<8x384xf32> to vector<8x128xf32>
    %54 = vector.extract_strided_slice %50 {offsets = [0, 128], sizes = [8, 128], strides = [1, 1]} : vector<8x384xf32> to vector<8x128xf32>
    %55 = vector.extract_strided_slice %50 {offsets = [0, 256], sizes = [8, 128], strides = [1, 1]} : vector<8x384xf32> to vector<8x128xf32>
    %56 = arith.mulf %54, %40 : vector<8x128xf32>
    %57 = arith.mulf %53, %52 : vector<8x128xf32>
    %58 = arith.addf %56, %57 : vector<8x128xf32>
    %59 = math.tanh %58 : vector<8x128xf32>
    %60 = arith.mulf %55, %59 : vector<8x128xf32>
    %c8 = arith.constant 8 : index
    %c0_27 = arith.constant 0 : index
    %61 = vector.load %arg10[%c8, %c0_27] : memref<64x512xf32, #tpu.memory_space<vmem>>, vector<8x512xf32>
    %c0_28 = arith.constant 0 : index
    %c0_29 = arith.constant 0 : index
    %62 = vector.load %arg8[%c0_28, %c0_29] : memref<128x512xf32, #tpu.memory_space<vmem>>, vector<128x512xf32>
    %cst_30 = arith.constant dense<0.000000e+00> : vector<8x512xf32>
    %63 = tpu.matmul %60, %62, %cst_30 {dimension_numbers = #tpu.dot_dimension_numbers<[1], [0], [0], [1], [0, 0, 1, 1], [], []>} : vector<8x128xf32>, vector<128x512xf32>, vector<8x512xf32> -> vector<8x512xf32>
    %64 = arith.addf %61, %63 : vector<8x512xf32>
    %65 = vector.extract_strided_slice %64 {offsets = [0, 0], sizes = [8, 384], strides = [1, 1]} : vector<8x512xf32> to vector<8x384xf32>
    %66 = arith.negf %65 : vector<8x384xf32>
    %67 = math.exp %66 : vector<8x384xf32>
    %cst_31 = arith.constant 1.000000e+00 : f32
    %68 = vector.broadcast %cst_31 : f32 to vector<8x384xf32>
    %69 = arith.addf %68, %67 : vector<8x384xf32>
    %70 = arith.divf %68, %69 : vector<8x384xf32>
    %71 = vector.extract_strided_slice %64 {offsets = [0, 384], sizes = [8, 128], strides = [1, 1]} : vector<8x512xf32> to vector<8x128xf32>
    %72 = math.tanh %71 : vector<8x128xf32>
    %73 = vector.extract_strided_slice %70 {offsets = [0, 0], sizes = [8, 128], strides = [1, 1]} : vector<8x384xf32> to vector<8x128xf32>
    %74 = vector.extract_strided_slice %70 {offsets = [0, 128], sizes = [8, 128], strides = [1, 1]} : vector<8x384xf32> to vector<8x128xf32>
    %75 = vector.extract_strided_slice %70 {offsets = [0, 256], sizes = [8, 128], strides = [1, 1]} : vector<8x384xf32> to vector<8x128xf32>
    %76 = arith.mulf %74, %58 : vector<8x128xf32>
    %77 = arith.mulf %73, %72 : vector<8x128xf32>
    %78 = arith.addf %76, %77 : vector<8x128xf32>
    %79 = math.tanh %78 : vector<8x128xf32>
    %80 = arith.mulf %75, %79 : vector<8x128xf32>
    %c16 = arith.constant 16 : index
    %c0_32 = arith.constant 0 : index
    %81 = vector.load %arg10[%c16, %c0_32] : memref<64x512xf32, #tpu.memory_space<vmem>>, vector<8x512xf32>
    %c0_33 = arith.constant 0 : index
    %c0_34 = arith.constant 0 : index
    %82 = vector.load %arg8[%c0_33, %c0_34] : memref<128x512xf32, #tpu.memory_space<vmem>>, vector<128x512xf32>
    %cst_35 = arith.constant dense<0.000000e+00> : vector<8x512xf32>
    %83 = tpu.matmul %80, %82, %cst_35 {dimension_numbers = #tpu.dot_dimension_numbers<[1], [0], [0], [1], [0, 0, 1, 1], [], []>} : vector<8x128xf32>, vector<128x512xf32>, vector<8x512xf32> -> vector<8x512xf32>
    %84 = arith.addf %81, %83 : vector<8x512xf32>
    %85 = vector.extract_strided_slice %84 {offsets = [0, 0], sizes = [8, 384], strides = [1, 1]} : vector<8x512xf32> to vector<8x384xf32>
    %86 = arith.negf %85 : vector<8x384xf32>
    %87 = math.exp %86 : vector<8x384xf32>
    %cst_36 = arith.constant 1.000000e+00 : f32
    %88 = vector.broadcast %cst_36 : f32 to vector<8x384xf32>
    %89 = arith.addf %88, %87 : vector<8x384xf32>
    %90 = arith.divf %88, %89 : vector<8x384xf32>
    %91 = vector.extract_strided_slice %84 {offsets = [0, 384], sizes = [8, 128], strides = [1, 1]} : vector<8x512xf32> to vector<8x128xf32>
    %92 = math.tanh %91 : vector<8x128xf32>
    %93 = vector.extract_strided_slice %90 {offsets = [0, 0], sizes = [8, 128], strides = [1, 1]} : vector<8x384xf32> to vector<8x128xf32>
    %94 = vector.extract_strided_slice %90 {offsets = [0, 128], sizes = [8, 128], strides = [1, 1]} : vector<8x384xf32> to vector<8x128xf32>
    %95 = vector.extract_strided_slice %90 {offsets = [0, 256], sizes = [8, 128], strides = [1, 1]} : vector<8x384xf32> to vector<8x128xf32>
    %96 = arith.mulf %94, %78 : vector<8x128xf32>
    %97 = arith.mulf %93, %92 : vector<8x128xf32>
    %98 = arith.addf %96, %97 : vector<8x128xf32>
    %99 = math.tanh %98 : vector<8x128xf32>
    %100 = arith.mulf %95, %99 : vector<8x128xf32>
    %c24 = arith.constant 24 : index
    %c0_37 = arith.constant 0 : index
    %101 = vector.load %arg10[%c24, %c0_37] : memref<64x512xf32, #tpu.memory_space<vmem>>, vector<8x512xf32>
    %c0_38 = arith.constant 0 : index
    %c0_39 = arith.constant 0 : index
    %102 = vector.load %arg8[%c0_38, %c0_39] : memref<128x512xf32, #tpu.memory_space<vmem>>, vector<128x512xf32>
    %cst_40 = arith.constant dense<0.000000e+00> : vector<8x512xf32>
    %103 = tpu.matmul %100, %102, %cst_40 {dimension_numbers = #tpu.dot_dimension_numbers<[1], [0], [0], [1], [0, 0, 1, 1], [], []>} : vector<8x128xf32>, vector<128x512xf32>, vector<8x512xf32> -> vector<8x512xf32>
    %104 = arith.addf %101, %103 : vector<8x512xf32>
    %105 = vector.extract_strided_slice %104 {offsets = [0, 0], sizes = [8, 384], strides = [1, 1]} : vector<8x512xf32> to vector<8x384xf32>
    %106 = arith.negf %105 : vector<8x384xf32>
    %107 = math.exp %106 : vector<8x384xf32>
    %cst_41 = arith.constant 1.000000e+00 : f32
    %108 = vector.broadcast %cst_41 : f32 to vector<8x384xf32>
    %109 = arith.addf %108, %107 : vector<8x384xf32>
    %110 = arith.divf %108, %109 : vector<8x384xf32>
    %111 = vector.extract_strided_slice %104 {offsets = [0, 384], sizes = [8, 128], strides = [1, 1]} : vector<8x512xf32> to vector<8x128xf32>
    %112 = math.tanh %111 : vector<8x128xf32>
    %113 = vector.extract_strided_slice %110 {offsets = [0, 0], sizes = [8, 128], strides = [1, 1]} : vector<8x384xf32> to vector<8x128xf32>
    %114 = vector.extract_strided_slice %110 {offsets = [0, 128], sizes = [8, 128], strides = [1, 1]} : vector<8x384xf32> to vector<8x128xf32>
    %115 = vector.extract_strided_slice %110 {offsets = [0, 256], sizes = [8, 128], strides = [1, 1]} : vector<8x384xf32> to vector<8x128xf32>
    %116 = arith.mulf %114, %98 : vector<8x128xf32>
    %117 = arith.mulf %113, %112 : vector<8x128xf32>
    %118 = arith.addf %116, %117 : vector<8x128xf32>
    %119 = math.tanh %118 : vector<8x128xf32>
    %120 = arith.mulf %115, %119 : vector<8x128xf32>
    %c32 = arith.constant 32 : index
    %c0_42 = arith.constant 0 : index
    %121 = vector.load %arg10[%c32, %c0_42] : memref<64x512xf32, #tpu.memory_space<vmem>>, vector<8x512xf32>
    %c0_43 = arith.constant 0 : index
    %c0_44 = arith.constant 0 : index
    %122 = vector.load %arg8[%c0_43, %c0_44] : memref<128x512xf32, #tpu.memory_space<vmem>>, vector<128x512xf32>
    %cst_45 = arith.constant dense<0.000000e+00> : vector<8x512xf32>
    %123 = tpu.matmul %120, %122, %cst_45 {dimension_numbers = #tpu.dot_dimension_numbers<[1], [0], [0], [1], [0, 0, 1, 1], [], []>} : vector<8x128xf32>, vector<128x512xf32>, vector<8x512xf32> -> vector<8x512xf32>
    %124 = arith.addf %121, %123 : vector<8x512xf32>
    %125 = vector.extract_strided_slice %124 {offsets = [0, 0], sizes = [8, 384], strides = [1, 1]} : vector<8x512xf32> to vector<8x384xf32>
    %126 = arith.negf %125 : vector<8x384xf32>
    %127 = math.exp %126 : vector<8x384xf32>
    %cst_46 = arith.constant 1.000000e+00 : f32
    %128 = vector.broadcast %cst_46 : f32 to vector<8x384xf32>
    %129 = arith.addf %128, %127 : vector<8x384xf32>
    %130 = arith.divf %128, %129 : vector<8x384xf32>
    %131 = vector.extract_strided_slice %124 {offsets = [0, 384], sizes = [8, 128], strides = [1, 1]} : vector<8x512xf32> to vector<8x128xf32>
    %132 = math.tanh %131 : vector<8x128xf32>
    %133 = vector.extract_strided_slice %130 {offsets = [0, 0], sizes = [8, 128], strides = [1, 1]} : vector<8x384xf32> to vector<8x128xf32>
    %134 = vector.extract_strided_slice %130 {offsets = [0, 128], sizes = [8, 128], strides = [1, 1]} : vector<8x384xf32> to vector<8x128xf32>
    %135 = vector.extract_strided_slice %130 {offsets = [0, 256], sizes = [8, 128], strides = [1, 1]} : vector<8x384xf32> to vector<8x128xf32>
    %136 = arith.mulf %134, %118 : vector<8x128xf32>
    %137 = arith.mulf %133, %132 : vector<8x128xf32>
    %138 = arith.addf %136, %137 : vector<8x128xf32>
    %139 = math.tanh %138 : vector<8x128xf32>
    %140 = arith.mulf %135, %139 : vector<8x128xf32>
    %c40 = arith.constant 40 : index
    %c0_47 = arith.constant 0 : index
    %141 = vector.load %arg10[%c40, %c0_47] : memref<64x512xf32, #tpu.memory_space<vmem>>, vector<8x512xf32>
    %c0_48 = arith.constant 0 : index
    %c0_49 = arith.constant 0 : index
    %142 = vector.load %arg8[%c0_48, %c0_49] : memref<128x512xf32, #tpu.memory_space<vmem>>, vector<128x512xf32>
    %cst_50 = arith.constant dense<0.000000e+00> : vector<8x512xf32>
    %143 = tpu.matmul %140, %142, %cst_50 {dimension_numbers = #tpu.dot_dimension_numbers<[1], [0], [0], [1], [0, 0, 1, 1], [], []>} : vector<8x128xf32>, vector<128x512xf32>, vector<8x512xf32> -> vector<8x512xf32>
    %144 = arith.addf %141, %143 : vector<8x512xf32>
    %145 = vector.extract_strided_slice %144 {offsets = [0, 0], sizes = [8, 384], strides = [1, 1]} : vector<8x512xf32> to vector<8x384xf32>
    %146 = arith.negf %145 : vector<8x384xf32>
    %147 = math.exp %146 : vector<8x384xf32>
    %cst_51 = arith.constant 1.000000e+00 : f32
    %148 = vector.broadcast %cst_51 : f32 to vector<8x384xf32>
    %149 = arith.addf %148, %147 : vector<8x384xf32>
    %150 = arith.divf %148, %149 : vector<8x384xf32>
    %151 = vector.extract_strided_slice %144 {offsets = [0, 384], sizes = [8, 128], strides = [1, 1]} : vector<8x512xf32> to vector<8x128xf32>
    %152 = math.tanh %151 : vector<8x128xf32>
    %153 = vector.extract_strided_slice %150 {offsets = [0, 0], sizes = [8, 128], strides = [1, 1]} : vector<8x384xf32> to vector<8x128xf32>
    %154 = vector.extract_strided_slice %150 {offsets = [0, 128], sizes = [8, 128], strides = [1, 1]} : vector<8x384xf32> to vector<8x128xf32>
    %155 = vector.extract_strided_slice %150 {offsets = [0, 256], sizes = [8, 128], strides = [1, 1]} : vector<8x384xf32> to vector<8x128xf32>
    %156 = arith.mulf %154, %138 : vector<8x128xf32>
    %157 = arith.mulf %153, %152 : vector<8x128xf32>
    %158 = arith.addf %156, %157 : vector<8x128xf32>
    %159 = math.tanh %158 : vector<8x128xf32>
    %160 = arith.mulf %155, %159 : vector<8x128xf32>
    %c48 = arith.constant 48 : index
    %c0_52 = arith.constant 0 : index
    %161 = vector.load %arg10[%c48, %c0_52] : memref<64x512xf32, #tpu.memory_space<vmem>>, vector<8x512xf32>
    %c0_53 = arith.constant 0 : index
    %c0_54 = arith.constant 0 : index
    %162 = vector.load %arg8[%c0_53, %c0_54] : memref<128x512xf32, #tpu.memory_space<vmem>>, vector<128x512xf32>
    %cst_55 = arith.constant dense<0.000000e+00> : vector<8x512xf32>
    %163 = tpu.matmul %160, %162, %cst_55 {dimension_numbers = #tpu.dot_dimension_numbers<[1], [0], [0], [1], [0, 0, 1, 1], [], []>} : vector<8x128xf32>, vector<128x512xf32>, vector<8x512xf32> -> vector<8x512xf32>
    %164 = arith.addf %161, %163 : vector<8x512xf32>
    %165 = vector.extract_strided_slice %164 {offsets = [0, 0], sizes = [8, 384], strides = [1, 1]} : vector<8x512xf32> to vector<8x384xf32>
    %166 = arith.negf %165 : vector<8x384xf32>
    %167 = math.exp %166 : vector<8x384xf32>
    %cst_56 = arith.constant 1.000000e+00 : f32
    %168 = vector.broadcast %cst_56 : f32 to vector<8x384xf32>
    %169 = arith.addf %168, %167 : vector<8x384xf32>
    %170 = arith.divf %168, %169 : vector<8x384xf32>
    %171 = vector.extract_strided_slice %164 {offsets = [0, 384], sizes = [8, 128], strides = [1, 1]} : vector<8x512xf32> to vector<8x128xf32>
    %172 = math.tanh %171 : vector<8x128xf32>
    %173 = vector.extract_strided_slice %170 {offsets = [0, 0], sizes = [8, 128], strides = [1, 1]} : vector<8x384xf32> to vector<8x128xf32>
    %174 = vector.extract_strided_slice %170 {offsets = [0, 128], sizes = [8, 128], strides = [1, 1]} : vector<8x384xf32> to vector<8x128xf32>
    %175 = vector.extract_strided_slice %170 {offsets = [0, 256], sizes = [8, 128], strides = [1, 1]} : vector<8x384xf32> to vector<8x128xf32>
    %176 = arith.mulf %174, %158 : vector<8x128xf32>
    %177 = arith.mulf %173, %172 : vector<8x128xf32>
    %178 = arith.addf %176, %177 : vector<8x128xf32>
    %179 = math.tanh %178 : vector<8x128xf32>
    %180 = arith.mulf %175, %179 : vector<8x128xf32>
    %c56 = arith.constant 56 : index
    %c0_57 = arith.constant 0 : index
    %181 = vector.load %arg10[%c56, %c0_57] : memref<64x512xf32, #tpu.memory_space<vmem>>, vector<8x512xf32>
    %c0_58 = arith.constant 0 : index
    %c0_59 = arith.constant 0 : index
    %182 = vector.load %arg8[%c0_58, %c0_59] : memref<128x512xf32, #tpu.memory_space<vmem>>, vector<128x512xf32>
    %cst_60 = arith.constant dense<0.000000e+00> : vector<8x512xf32>
    %183 = tpu.matmul %180, %182, %cst_60 {dimension_numbers = #tpu.dot_dimension_numbers<[1], [0], [0], [1], [0, 0, 1, 1], [], []>} : vector<8x128xf32>, vector<128x512xf32>, vector<8x512xf32> -> vector<8x512xf32>
    %184 = arith.addf %181, %183 : vector<8x512xf32>
    %185 = vector.extract_strided_slice %184 {offsets = [0, 0], sizes = [8, 384], strides = [1, 1]} : vector<8x512xf32> to vector<8x384xf32>
    %186 = arith.negf %185 : vector<8x384xf32>
    %187 = math.exp %186 : vector<8x384xf32>
    %cst_61 = arith.constant 1.000000e+00 : f32
    %188 = vector.broadcast %cst_61 : f32 to vector<8x384xf32>
    %189 = arith.addf %188, %187 : vector<8x384xf32>
    %190 = arith.divf %188, %189 : vector<8x384xf32>
    %191 = vector.extract_strided_slice %184 {offsets = [0, 384], sizes = [8, 128], strides = [1, 1]} : vector<8x512xf32> to vector<8x128xf32>
    %192 = math.tanh %191 : vector<8x128xf32>
    %193 = vector.extract_strided_slice %190 {offsets = [0, 0], sizes = [8, 128], strides = [1, 1]} : vector<8x384xf32> to vector<8x128xf32>
    %194 = vector.extract_strided_slice %190 {offsets = [0, 128], sizes = [8, 128], strides = [1, 1]} : vector<8x384xf32> to vector<8x128xf32>
    %195 = vector.extract_strided_slice %190 {offsets = [0, 256], sizes = [8, 128], strides = [1, 1]} : vector<8x384xf32> to vector<8x128xf32>
    %196 = arith.mulf %194, %178 : vector<8x128xf32>
    %197 = arith.mulf %193, %192 : vector<8x128xf32>
    %198 = arith.addf %196, %197 : vector<8x128xf32>
    %199 = math.tanh %198 : vector<8x128xf32>
    %200 = arith.mulf %195, %199 : vector<8x128xf32>
    %c0_62 = arith.constant 0 : index
    %c0_63 = arith.constant 0 : index
    %201 = vector.load %arg9[%c0_62, %c0_63] : memref<8x128xf32, #tpu.memory_space<vmem>>, vector<8x128xf32>
    tpu.vector_store %arg9[%c0_62, %c0_63], %200 {strides = array<i32>} : memref<8x128xf32, #tpu.memory_space<vmem>>, vector<8x128xf32>,
    return
  }
  func.func @transform_0(%arg0: i32) -> (i32, i32, i32) {
    %c0_i32 = arith.constant 0 : i32
    %c0_i32_0 = arith.constant 0 : i32
    %c0_i32_1 = arith.constant 0 : i32
    return %arg0, %c0_i32, %c0_i32_0 : i32, i32, i32
  }
  func.func @transform_1(%arg0: i32) -> (i32, i32) {
    %c0_i32 = arith.constant 0 : i32
    %c0_i32_0 = arith.constant 0 : i32
    %c0_i32_1 = arith.constant 0 : i32
    return %c0_i32, %c0_i32_0 : i32, i32
  }
  func.func @transform_2(%arg0: i32) -> (i32, i32) {
    %c0_i32 = arith.constant 0 : i32
    %c0_i32_0 = arith.constant 0 : i32
    %c0_i32_1 = arith.constant 0 : i32
    return %c0_i32, %c0_i32_0 : i32, i32
  }
  func.func @transform_3(%arg0: i32) -> (i32, i32) {
    %c0_i32 = arith.constant 0 : i32
    %c0_i32_0 = arith.constant 0 : i32
    %c0_i32_1 = arith.constant 0 : i32
    return %c0_i32, %c0_i32_0 : i32, i32
  }
  func.func @transform_4(%arg0: i32) -> (i32, i32) {
    %c0_i32 = arith.constant 0 : i32
    %c0_i32_0 = arith.constant 0 : i32
    %c0_i32_1 = arith.constant 0 : i32
    return %c0_i32, %c0_i32_0 : i32, i32
  }
  func.func @transform_5(%arg0: i32) -> (i32, i32) {
    %c0_i32 = arith.constant 0 : i32
    %c0_i32_0 = arith.constant 0 : i32
    %c0_i32_1 = arith.constant 0 : i32
    return %c0_i32, %c0_i32_0 : i32, i32
  }
  func.func @transform_6(%arg0: i32) -> (i32, i32) {
    %c0_i32 = arith.constant 0 : i32
    %c0_i32_0 = arith.constant 0 : i32
    %c0_i32_1 = arith.constant 0 : i32
    return %c0_i32, %c0_i32_0 : i32, i32
  }
  func.func @transform_7(%arg0: i32) -> (i32, i32) {
    %c0_i32 = arith.constant 0 : i32
    %c0_i32_0 = arith.constant 0 : i32
    %c0_i32_1 = arith.constant 0 : i32
    return %c0_i32, %c0_i32_0 : i32, i32
  }
  func.func @transform_8(%arg0: i32) -> (i32, i32) {
    %c0_i32 = arith.constant 0 : i32
    %c0_i32_0 = arith.constant 0 : i32
    return %arg0, %c0_i32 : i32, i32
  }
}

</mosaic_0001>

<llo_original>
// kernel: tpu_custom_call.1
$region0: #{tpu_custom_call.1}
  #allocation0 [shape = 'u32[]', space=smem, size = 0x4, offset = 0x4, fixed_abs, tag = 'smem constant byte address 0x4 - core index']
  #allocation1 [shape = 'u32[144,128]{1,0:T(1,128)}', space=vmem, size = 0x12000, scoped, tag = 'internal scratch']
  #allocation2 [shape = 'f32[64,512]{1,0:T(8,128)}', space=vmem, size = 0x20000, scoped, tag = 'scratch operand']
  %s0 = inlined_call_operand.vmem [shape: f32[1,64,3], index: 0, kind: input, shape index: {}]
  %s1 = inlined_call_operand.vmem [shape: f32[3,32], index: 1, kind: input, shape index: {}]
  %s2 = inlined_call_operand.vmem [shape: f32[1,32], index: 2, kind: input, shape index: {}]
  %s3 = inlined_call_operand.vmem [shape: f32[32,16], index: 3, kind: input, shape index: {}]
  %s4 = inlined_call_operand.vmem [shape: f32[1,16], index: 4, kind: input, shape index: {}]
  %s5 = inlined_call_operand.vmem [shape: f32[16,512], index: 5, kind: input, shape index: {}]
  %s6 = inlined_call_operand.vmem [shape: f32[1,512], index: 6, kind: input, shape index: {}]
  %s7 = inlined_call_operand.hbm [shape: f32[128,512], index: 7, kind: input, shape index: {}]
  %s8 = inlined_call_operand.hbm [shape: f32[8,128], index: 8, kind: output, shape index: {}]
  %s9 = sld [smem:[#allocation0]]
  $region46: #{tpu_custom_call.1} parent=0
    _
  %s11 = ssub.s32 1, %s9
  %s12 = scalar_select 0, %s11, %s9
  $region1: #{tpu_custom_call.1} parent=0
    #allocation3 [shape = 'u8[262144]{0}', space=vmem, size = 0x40000, scoped, tag = 'input window, operand 7, single buffered']
    #allocation4 [shape = 's32[1]{0}', space=sflag, size = 0x4, scoped, tag = 'scoped memory for tpu_custom_call.1']
    #allocation5 [shape = 's32[1]{0}', space=sflag, size = 0x4, scoped, tag = 'scoped memory for tpu_custom_call.1']
    #allocation6 [shape = 'u8[4096]{0}', space=vmem, size = 0x1000, scoped, tag = 'output window, operand 0, single buffered']
    %13 = vsyncpa [#allocation4], 0
    %14 = vsyncpa [#allocation5], 0
    // Predicated region
    $region2: #{tpu_custom_call.1} parent=1 // pred_check
      _
    $region3: #{tpu_custom_call.1} parent=1 // pred_check_branch
      %16 = sbr.rel (0) target = $region5
    $region4: #{tpu_custom_call.1} parent=1 // pred_region
      _
    $region5: #{tpu_custom_call.1} parent=1 // pred_fallthru
      _
    // Predicated region
    $region6: #{tpu_custom_call.1} parent=1 // pred_check
      _
    $region7: #{tpu_custom_call.1} parent=1 // pred_check_branch
      %18 = sbr.rel (0) target = $region9
    $region8: #{tpu_custom_call.1} parent=1 // pred_region
      _
    $region9: #{tpu_custom_call.1} parent=1 // pred_fallthru
      _
    // Predicated region
    $region10: #{tpu_custom_call.1} parent=1 // pred_check
      _
    $region11: #{tpu_custom_call.1} parent=1 // pred_check_branch
      %20 = sbr.rel (0) target = $region13
    $region12: #{tpu_custom_call.1} parent=1 // pred_region
      _
    $region13: #{tpu_custom_call.1} parent=1 // pred_fallthru
      _
    // Predicated region
    $region14: #{tpu_custom_call.1} parent=1 // pred_check
      _
    $region15: #{tpu_custom_call.1} parent=1 // pred_check_branch
      %22 = sbr.rel (0) target = $region17
    $region16: #{tpu_custom_call.1} parent=1 // pred_region
      _
    $region17: #{tpu_custom_call.1} parent=1 // pred_fallthru
      _
    // Predicated region
    $region18: #{tpu_custom_call.1} parent=1 // pred_check
      _
    $region19: #{tpu_custom_call.1} parent=1 // pred_check_branch
      %24 = sbr.rel (0) target = $region21
    $region20: #{tpu_custom_call.1} parent=1 // pred_region
      _
    $region21: #{tpu_custom_call.1} parent=1 // pred_fallthru
      _
    // Predicated region
    $region22: #{tpu_custom_call.1} parent=1 // pred_check
      _
    $region23: #{tpu_custom_call.1} parent=1 // pred_check_branch
      %26 = sbr.rel (0) target = $region25
    $region24: #{tpu_custom_call.1} parent=1 // pred_region
      _
    $region25: #{tpu_custom_call.1} parent=1 // pred_fallthru
      _
    // Predicated region
    $region26: #{tpu_custom_call.1} parent=1 // pred_check
      _
    $region27: #{tpu_custom_call.1} parent=1 // pred_check_branch
      %28 = sbr.rel (0) target = $region29
    $region28: #{tpu_custom_call.1} parent=1 // pred_region
      _
    $region29: #{tpu_custom_call.1} parent=1 // pred_fallthru
      _
    // Predicated region
    $region30: #{tpu_custom_call.1} parent=1 // pred_check
      _
    $region31: #{tpu_custom_call.1} parent=1 // pred_check_branch
      %30 = sbr.rel (0) target = $region33
    $region32: #{tpu_custom_call.1} parent=1 // pred_region
      %s32 = ssub.s32 8192, 8192
      %33 = vsyncadd [#allocation4], %s32
      %s34 = sshll.u32 [#allocation3], 4
      %s35 = int_to_ptr.vmem [resolvable:$true] %s34
      %40 = dma.hbm_to_vmem [thread:$0]  %s7, 8192, %s35, [#allocation4], 512, 512, 32
    $region33: #{tpu_custom_call.1} parent=1 // pred_fallthru
      _
    // Predicated region
    $region34: #{tpu_custom_call.1} parent=1 // pred_check
      _
    $region35: #{tpu_custom_call.1} parent=1 // pred_check_branch
      %42 = sbr.rel (0) target = $region37
    $region36: #{tpu_custom_call.1} parent=1 // pred_region
      %43 = dma.done [#allocation4], 8192
    $region37: #{tpu_custom_call.1} parent=1 // pred_fallthru
      _
    %v44 = vld [vmem:[%s0] sm:$0xff]
    %v45 = vld [vmem:[%s0 + $0x8] sm:$0xff]
    %v46 = vld [vmem:[%s0 + $0x10] sm:$0xff]
    %v47 = vld [vmem:[%s0 + $0x18] sm:$0xff]
    %v48 = vld [vmem:[%s0 + $0x20] sm:$0xff]
    %v49 = vld [vmem:[%s0 + $0x28] sm:$0xff]
    %v50 = vld [vmem:[%s0 + $0x30] sm:$0xff]
    %v51 = vld [vmem:[%s0 + $0x38] sm:$0xff]
    %v52 = vld [vmem:[%s1] sm:$0x7]
    %54 = vset.pattern.permute.xlu0 0
    %55 = vperm.xlu0 %54, %v44
    %v56 = vpop.permute.xlu0 %55
    %59 = vset.pattern.permute.xlu0 0
    %60 = vperm.xlu0 %59, %v45
    %v61 = vpop.permute.xlu0 %60
    %64 = vset.pattern.permute.xlu0 0
    %65 = vperm.xlu0 %64, %v46
    %v66 = vpop.permute.xlu0 %65
    %69 = vset.pattern.permute.xlu0 0
    %70 = vperm.xlu0 %69, %v47
    %v71 = vpop.permute.xlu0 %70
    %74 = vset.pattern.permute.xlu0 0
    %75 = vperm.xlu0 %74, %v48
    %v76 = vpop.permute.xlu0 %75
    %79 = vset.pattern.permute.xlu0 0
    %80 = vperm.xlu0 %79, %v49
    %v81 = vpop.permute.xlu0 %80
    %84 = vset.pattern.permute.xlu0 0
    %85 = vperm.xlu0 %84, %v50
    %v86 = vpop.permute.xlu0 %85
    %89 = vset.pattern.permute.xlu0 0
    %90 = vperm.xlu0 %89, %v51
    %v91 = vpop.permute.xlu0 %90
    %v93 = vlaneseq
    %v94 = vshrl.u32 %v93, 7
    %v95 = vsub.s32 0, %v94
    %v96 = vrot.slane %v52, %v95
    %v97 = vmul.f32 %v56, %v96
    %v98 = vmul.f32 %v61, %v96
    %v99 = vmul.f32 %v66, %v96
    %v100 = vmul.f32 %v71, %v96
    %v101 = vmul.f32 %v76, %v96
    %v102 = vmul.f32 %v81, %v96
    %v103 = vmul.f32 %v86, %v96
    %v104 = vmul.f32 %v91, %v96
    %105 = vset.pattern.permute.xlu0 1
    %106 = vperm.xlu0 %105, %v44
    %v107 = vpop.permute.xlu0 %106
    %109 = vset.pattern.permute.xlu0 1
    %110 = vperm.xlu0 %109, %v45
    %v111 = vpop.permute.xlu0 %110
    %113 = vset.pattern.permute.xlu0 1
    %114 = vperm.xlu0 %113, %v46
    %v115 = vpop.permute.xlu0 %114
    %117 = vset.pattern.permute.xlu0 1
    %118 = vperm.xlu0 %117, %v47
    %v119 = vpop.permute.xlu0 %118
    %121 = vset.pattern.permute.xlu0 1
    %122 = vperm.xlu0 %121, %v48
    %v123 = vpop.permute.xlu0 %122
    %125 = vset.pattern.permute.xlu0 1
    %126 = vperm.xlu0 %125, %v49
    %v127 = vpop.permute.xlu0 %126
    %129 = vset.pattern.permute.xlu0 1
    %130 = vperm.xlu0 %129, %v50
    %v131 = vpop.permute.xlu0 %130
    %133 = vset.pattern.permute.xlu0 1
    %134 = vperm.xlu0 %133, %v51
    %v135 = vpop.permute.xlu0 %134
    %v137 = vlaneseq
    %v138 = vshrl.u32 %v137, 7
    %v139 = vsub.s32 1, %v138
    %v140 = vrot.slane %v52, %v139
    %v141 = vmul.f32 %v107, %v140
    %v142 = vmul.f32 %v111, %v140
    %v143 = vmul.f32 %v115, %v140
    %v144 = vmul.f32 %v119, %v140
    %v145 = vmul.f32 %v123, %v140
    %v146 = vmul.f32 %v127, %v140
    %v147 = vmul.f32 %v131, %v140
    %v148 = vmul.f32 %v135, %v140
    %v149 = vadd.f32 %v97, %v141
    %v150 = vadd.f32 %v98, %v142
    %v151 = vadd.f32 %v99, %v143
    %v152 = vadd.f32 %v100, %v144
    %v153 = vadd.f32 %v101, %v145
    %v154 = vadd.f32 %v102, %v146
    %v155 = vadd.f32 %v103, %v147
    %v156 = vadd.f32 %v104, %v148
    %157 = vset.pattern.permute.xlu0 2
    %158 = vperm.xlu0 %157, %v44
    %v159 = vpop.permute.xlu0 %158
    %161 = vset.pattern.permute.xlu0 2
    %162 = vperm.xlu0 %161, %v45
    %v163 = vpop.permute.xlu0 %162
    %165 = vset.pattern.permute.xlu0 2
    %166 = vperm.xlu0 %165, %v46
    %v167 = vpop.permute.xlu0 %166
    %169 = vset.pattern.permute.xlu0 2
    %170 = vperm.xlu0 %169, %v47
    %v171 = vpop.permute.xlu0 %170
    %173 = vset.pattern.permute.xlu0 2
    %174 = vperm.xlu0 %173, %v48
    %v175 = vpop.permute.xlu0 %174
    %177 = vset.pattern.permute.xlu0 2
    %178 = vperm.xlu0 %177, %v49
    %v179 = vpop.permute.xlu0 %178
    %181 = vset.pattern.permute.xlu0 2
    %182 = vperm.xlu0 %181, %v50
    %v183 = vpop.permute.xlu0 %182
    %185 = vset.pattern.permute.xlu0 2
    %186 = vperm.xlu0 %185, %v51
    %v187 = vpop.permute.xlu0 %186
    %v189 = vlaneseq
    %v190 = vshrl.u32 %v189, 7
    %v191 = vsub.s32 2, %v190
    %v192 = vrot.slane %v52, %v191
    %v193 = vmul.f32 %v159, %v192
    %v194 = vmul.f32 %v163, %v192
    %v195 = vmul.f32 %v167, %v192
    %v196 = vmul.f32 %v171, %v192
    %v197 = vmul.f32 %v175, %v192
    %v198 = vmul.f32 %v179, %v192
    %v199 = vmul.f32 %v183, %v192
    %v200 = vmul.f32 %v187, %v192
    %v201 = vadd.f32 %v149, %v193
    %v202 = vadd.f32 %v150, %v194
    %v203 = vadd.f32 %v151, %v195
    %v204 = vadd.f32 %v152, %v196
    %v205 = vadd.f32 %v153, %v197
    %v206 = vadd.f32 %v154, %v198
    %v207 = vadd.f32 %v155, %v199
    %v208 = vadd.f32 %v156, %v200
    %v209 = vld [vmem:[%s2] sm:$0x1]
    %v211 = vlaneseq
    %v212 = vshrl.u32 %v211, 7
    %v213 = vsub.s32 0, %v212
    %v214 = vrot.slane %v209, %v213
    %v216 = vadd.f32 %v201, %v214
    %v217 = vadd.f32 %v202, %v214
    %v218 = vadd.f32 %v203, %v214
    %v219 = vadd.f32 %v204, %v214
    %v220 = vadd.f32 %v205, %v214
    %v221 = vadd.f32 %v206, %v214
    %v222 = vadd.f32 %v207, %v214
    %v223 = vadd.f32 %v208, %v214
    %vm224 = vcmp.gt.f32.partialorder %v216, 0.0
    %vm225 = vcmp.gt.f32.partialorder %v217, 0.0
    %vm226 = vcmp.gt.f32.partialorder %v218, 0.0
    %vm227 = vcmp.gt.f32.partialorder %v219, 0.0
    %vm228 = vcmp.gt.f32.partialorder %v220, 0.0
    %vm229 = vcmp.gt.f32.partialorder %v221, 0.0
    %vm230 = vcmp.gt.f32.partialorder %v222, 0.0
    %vm231 = vcmp.gt.f32.partialorder %v223, 0.0
    %v232 = vmul.f32 %v216, 0.01
    %v233 = vmul.f32 %v217, 0.01
    %v234 = vmul.f32 %v218, 0.01
    %v235 = vmul.f32 %v219, 0.01
    %v236 = vmul.f32 %v220, 0.01
    %v237 = vmul.f32 %v221, 0.01
    %v238 = vmul.f32 %v222, 0.01
    %v239 = vmul.f32 %v223, 0.01
    %v240 = vsel %vm224, %v216, %v232
    %v241 = vsel %vm225, %v217, %v233
    %v242 = vsel %vm226, %v218, %v234
    %v243 = vsel %vm227, %v219, %v235
    %v244 = vsel %vm228, %v220, %v236
    %v245 = vsel %vm229, %v221, %v237
    %v246 = vsel %vm230, %v222, %v238
    %v247 = vsel %vm231, %v223, %v239
    %v248 = vld [vmem:[%s3] sm:$0xff]
    %v249 = vld [vmem:[%s3 + $0x8] sm:$0xff]
    %v250 = vld [vmem:[%s3 + $0x10] sm:$0xff]
    %v251 = vld [vmem:[%s3 + $0x18] sm:$0xff]
    %v252 = vld [vmem:[%s4] sm:$0x1]
    %v254 = vlaneseq
    %v255 = vshrl.u32 %v254, 7
    %v256 = vsub.s32 0, %v255
    %v257 = vrot.slane %v252, %v256
    %vm259 = vcmask 261120
    %v261 = vsel %vm259, %v240, 0
    %v264 = vsel %vm259, %v241, 0
    %v267 = vsel %vm259, %v242, 0
    %v270 = vsel %vm259, %v243, 0
    %v273 = vsel %vm259, %v244, 0
    %v276 = vsel %vm259, %v245, 0
    %v279 = vsel %vm259, %v246, 0
    %v282 = vsel %vm259, %v247, 0
    %284 = vmatprep.subr.mxu0 0.0
    %285 = vmatpush1.msra.mxu0 %v248
    %286 = vmatprep.subr.mxu0 0.0
    %287 = vmatpush1.msra.mxu0 %v249
    %288 = vmatprep.subr.mxu0 0.0
    %289 = vmatpush1.msra.mxu0 %v250
    %290 = vmatprep.subr.mxu0 0.0
    %291 = vmatpush1.msra.mxu0 %v251
    %292 = vmatprep.subr.mxu0 0.0
    %293 = vmatpush1.msra.mxu0 0.0
    %294 = vmatprep.subr.mxu0 0.0
    %295 = vmatpush1.msra.mxu0 0.0
    %296 = vmatprep.subr.mxu0 0.0
    %297 = vmatpush1.msra.mxu0 0.0
    %298 = vmatprep.subr.mxu0 0.0
    %299 = vmatpush1.msra.mxu0 0.0
    %300 = vmatprep.subr.mxu0 0.0
    %301 = vmatpush1.msra.mxu0 0.0
    %302 = vmatprep.subr.mxu0 0.0
    %303 = vmatpush1.msra.mxu0 0.0
    %304 = vmatprep.subr.mxu0 0.0
    %305 = vmatpush1.msra.mxu0 0.0
    %306 = vmatprep.subr.mxu0 0.0
    %307 = vmatpush1.msra.mxu0 0.0
    %308 = vmatprep.subr.mxu0 0.0
    %309 = vmatpush1.msra.mxu0 0.0
    %310 = vmatprep.subr.mxu0 0.0
    %311 = vmatpush1.msra.mxu0 0.0
    %312 = vmatprep.subr.mxu0 0.0
    %313 = vmatpush1.msra.mxu0 0.0
    %314 = vmatprep.subr.mxu0 0.0
    %315 = vmatpush1.msra.mxu0 0.0
    %316 = vmatprep.subr.mxu0 0.0
    %317 = vmatpush1.msra.mxu0 0.0
    %318 = vmatprep.subr.mxu0 0.0
    %319 = vmatpush1.msra.mxu0 0.0
    %320 = vmatprep.subr.mxu0 0.0
    %321 = vmatpush1.msra.mxu0 0.0
    %322 = vmatprep.subr.mxu0 0.0
    %323 = vmatpush1.msra.mxu0 0.0
    %324 = vmatprep.subr.mxu0 0.0
    %325 = vmatpush1.msra.mxu0 0.0
    %326 = vmatprep.subr.mxu0 0.0
    %327 = vmatpush1.msra.mxu0 0.0
    %328 = vmatprep.subr.mxu0 0.0
    %329 = vmatpush1.msra.mxu0 0.0
    %330 = vmatprep.subr.mxu0 0.0
    %331 = vmatpush1.msra.mxu0 0.0
    %332 = vmatprep.subr.mxu0 0.0
    %333 = vmatpush1.msra.mxu0 0.0
    %334 = vmatprep.subr.mxu0 0.0
    %335 = vmatpush1.msra.mxu0 0.0
    %336 = vmatprep.subr.mxu0 0.0
    %337 = vmatpush1.msra.mxu0 0.0
    %338 = vmatprep.subr.mxu0 0.0
    %339 = vmatpush1.msra.mxu0 0.0
    %340 = vmatprep.subr.mxu0 0.0
    %341 = vmatpush1.msra.mxu0 0.0
    %342 = vmatprep.subr.mxu0 0.0
    %343 = vmatpush1.msra.mxu0 0.0
    %344 = vmatprep.subr.mxu0 0.0
    %345 = vmatpush1.msra.mxu0 0.0
    %346 = vmatprep.subr.mxu0 0.0
    %347 = vmatpush1.msra.mxu0 0.0
    %348 = vmatprep.mubr.f32.mxu0 0.0
    %349 = vmatmul.mubr.f32.gmra.mrb[0].mxu0 %v261
    %v350 = vpop.f32.mrb[0].mxu0
    %v351 = vadd.f32 %v257, %v350
    %v352 = vpop.f32.mrb[0].mxu0
    %353 = vmatprep.mubr.f32.mxu0 0.0
    %354 = vmatmul.mubr.f32.gmra.mrb[0].mxu0 %v264
    %v355 = vpop.f32.mrb[0].mxu0
    %v356 = vadd.f32 %v257, %v355
    %v357 = vpop.f32.mrb[0].mxu0
    %358 = vmatprep.mubr.f32.mxu0 0.0
    %359 = vmatmul.mubr.f32.gmra.mrb[0].mxu0 %v267
    %v360 = vpop.f32.mrb[0].mxu0
    %v361 = vadd.f32 %v257, %v360
    %v362 = vpop.f32.mrb[0].mxu0
    %363 = vmatprep.mubr.f32.mxu0 0.0
    %364 = vmatmul.mubr.f32.gmra.mrb[0].mxu0 %v270
    %v365 = vpop.f32.mrb[0].mxu0
    %v366 = vadd.f32 %v257, %v365
    %v367 = vpop.f32.mrb[0].mxu0
    %368 = vmatprep.mubr.f32.mxu0 0.0
    %369 = vmatmul.mubr.f32.gmra.mrb[0].mxu0 %v273
    %v370 = vpop.f32.mrb[0].mxu0
    %v371 = vadd.f32 %v257, %v370
    %v372 = vpop.f32.mrb[0].mxu0
    %373 = vmatprep.mubr.f32.mxu0 0.0
    %374 = vmatmul.mubr.f32.gmra.mrb[0].mxu0 %v276
    %v375 = vpop.f32.mrb[0].mxu0
    %v376 = vadd.f32 %v257, %v375
    %v377 = vpop.f32.mrb[0].mxu0
    %378 = vmatprep.mubr.f32.mxu0 0.0
    %379 = vmatmul.mubr.f32.gmra.mrb[0].mxu0 %v279
    %v380 = vpop.f32.mrb[0].mxu0
    %v381 = vadd.f32 %v257, %v380
    %v382 = vpop.f32.mrb[0].mxu0
    %383 = vmatprep.mubr.f32.mxu0 0.0
    %384 = vmatmul.mubr.f32.gmra.mrb[0].mxu0 %v282
    %v385 = vpop.f32.mrb[0].mxu0
    %v386 = vadd.f32 %v257, %v385
    %v387 = vpop.f32.mrb[0].mxu0
    %388 = vdwg.mxu0
    %v389 = vld [vmem:[%s5] sm:$0xff]
    %v390 = vld [vmem:[%s5 + $0x8] sm:$0xff]
    %v391 = vld [vmem:[%s5 + $0x10] sm:$0xff]
    %v392 = vld [vmem:[%s5 + $0x18] sm:$0xff]
    %v393 = vld [vmem:[%s5 + $0x20] sm:$0xff]
    %v394 = vld [vmem:[%s5 + $0x28] sm:$0xff]
    %v395 = vld [vmem:[%s5 + $0x30] sm:$0xff]
    %v396 = vld [vmem:[%s5 + $0x38] sm:$0xff]
    %v397 = vld [vmem:[%s6] sm:$0xf]
    %v399 = vlaneseq
    %v400 = vshrl.u32 %v399, 7
    %v401 = vsub.s32 0, %v400
    %v402 = vrot.slane %v397, %v401
    %v403 = vlaneseq
    %v404 = vshrl.u32 %v403, 7
    %v405 = vsub.s32 1, %v404
    %v406 = vrot.slane %v397, %v405
    %v407 = vlaneseq
    %v408 = vshrl.u32 %v407, 7
    %v409 = vsub.s32 2, %v408
    %v410 = vrot.slane %v397, %v409
    %v411 = vlaneseq
    %v412 = vshrl.u32 %v411, 7
    %v413 = vsub.s32 3, %v412
    %v414 = vrot.slane %v397, %v413
    %vm419 = vcmask 130048
    %v421 = vsel %vm419, %v351, 0
    %v424 = vsel %vm419, %v356, 0
    %v427 = vsel %vm419, %v361, 0
    %v430 = vsel %vm419, %v366, 0
    %v433 = vsel %vm419, %v371, 0
    %v436 = vsel %vm419, %v376, 0
    %v439 = vsel %vm419, %v381, 0
    %v442 = vsel %vm419, %v386, 0
    %444 = vmatprep.subr.mxu0 %v390
    %445 = vmatpush1.msra.mxu0 %v389
    %446 = vmatprep.subr.mxu0 %v394
    %447 = vmatpush1.msra.mxu0 %v393
    %448 = vmatprep.subr.mxu0 0.0
    %449 = vmatpush1.msra.mxu0 0.0
    %450 = vmatprep.subr.mxu0 0.0
    %451 = vmatpush1.msra.mxu0 0.0
    %452 = vmatprep.subr.mxu0 0.0
    %453 = vmatpush1.msra.mxu0 0.0
    %454 = vmatprep.subr.mxu0 0.0
    %455 = vmatpush1.msra.mxu0 0.0
    %456 = vmatprep.subr.mxu0 0.0
    %457 = vmatpush1.msra.mxu0 0.0
    %458 = vmatprep.subr.mxu0 0.0
    %459 = vmatpush1.msra.mxu0 0.0
    %460 = vmatprep.subr.mxu0 0.0
    %461 = vmatpush1.msra.mxu0 0.0
    %462 = vmatprep.subr.mxu0 0.0
    %463 = vmatpush1.msra.mxu0 0.0
    %464 = vmatprep.subr.mxu0 0.0
    %465 = vmatpush1.msra.mxu0 0.0
    %466 = vmatprep.subr.mxu0 0.0
    %467 = vmatpush1.msra.mxu0 0.0
    %468 = vmatprep.subr.mxu0 0.0
    %469 = vmatpush1.msra.mxu0 0.0
    %470 = vmatprep.subr.mxu0 0.0
    %471 = vmatpush1.msra.mxu0 0.0
    %472 = vmatprep.subr.mxu0 0.0
    %473 = vmatpush1.msra.mxu0 0.0
    %474 = vmatprep.subr.mxu0 0.0
    %475 = vmatpush1.msra.mxu0 0.0
    %476 = vmatprep.subr.mxu0 0.0
    %477 = vmatpush1.msra.mxu0 0.0
    %478 = vmatprep.subr.mxu0 0.0
    %479 = vmatpush1.msra.mxu0 0.0
    %480 = vmatprep.subr.mxu0 0.0
    %481 = vmatpush1.msra.mxu0 0.0
    %482 = vmatprep.subr.mxu0 0.0
    %483 = vmatpush1.msra.mxu0 0.0
    %484 = vmatprep.subr.mxu0 0.0
    %485 = vmatpush1.msra.mxu0 0.0
    %486 = vmatprep.subr.mxu0 0.0
    %487 = vmatpush1.msra.mxu0 0.0
    %488 = vmatprep.subr.mxu0 0.0
    %489 = vmatpush1.msra.mxu0 0.0
    %490 = vmatprep.subr.mxu0 0.0
    %491 = vmatpush1.msra.mxu0 0.0
    %492 = vmatprep.subr.mxu0 0.0
    %493 = vmatpush1.msra.mxu0 0.0
    %494 = vmatprep.subr.mxu0 0.0
    %495 = vmatpush1.msra.mxu0 0.0
    %496 = vmatprep.subr.mxu0 0.0
    %497 = vmatpush1.msra.mxu0 0.0
    %498 = vmatprep.subr.mxu0 0.0
    %499 = vmatpush1.msra.mxu0 0.0
    %500 = vmatprep.subr.mxu0 0.0
    %501 = vmatpush1.msra.mxu0 0.0
    %502 = vmatprep.subr.mxu0 0.0
    %503 = vmatpush1.msra.mxu0 0.0
    %504 = vmatprep.subr.mxu0 0.0
    %505 = vmatpush1.msra.mxu0 0.0
    %506 = vmatprep.subr.mxu0 0.0
    %507 = vmatpush1.msra.mxu0 0.0
    %508 = vmatprep.mubr.f32.mxu0 0.0
    %509 = vmatmul.mubr.f32.gmra.mrb[0].mxu0 %v421
    %v510 = vpop.f32.mrb[0].mxu0
    %v511 = vadd.f32 %v402, %v510
    %v512 = vpop.f32.mrb[0].mxu0
    %v513 = vadd.f32 %v406, %v512
    %514 = vmatprep.mubr.f32.mxu0 0.0
    %515 = vmatmul.mubr.f32.gmra.mrb[0].mxu0 %v424
    %v516 = vpop.f32.mrb[0].mxu0
    %v517 = vadd.f32 %v402, %v516
    %v518 = vpop.f32.mrb[0].mxu0
    %v519 = vadd.f32 %v406, %v518
    %520 = vmatprep.mubr.f32.mxu0 0.0
    %521 = vmatmul.mubr.f32.gmra.mrb[0].mxu0 %v427
    %v522 = vpop.f32.mrb[0].mxu0
    %v523 = vadd.f32 %v402, %v522
    %v524 = vpop.f32.mrb[0].mxu0
    %v525 = vadd.f32 %v406, %v524
    %526 = vmatprep.mubr.f32.mxu0 0.0
    %527 = vmatmul.mubr.f32.gmra.mrb[0].mxu0 %v430
    %v528 = vpop.f32.mrb[0].mxu0
    %v529 = vadd.f32 %v402, %v528
    %v530 = vpop.f32.mrb[0].mxu0
    %v531 = vadd.f32 %v406, %v530
    %532 = vmatprep.mubr.f32.mxu0 0.0
    %533 = vmatmul.mubr.f32.gmra.mrb[0].mxu0 %v433
    %v534 = vpop.f32.mrb[0].mxu0
    %v535 = vadd.f32 %v402, %v534
    %v536 = vpop.f32.mrb[0].mxu0
    %v537 = vadd.f32 %v406, %v536
    %538 = vmatprep.mubr.f32.mxu0 0.0
    %539 = vmatmul.mubr.f32.gmra.mrb[0].mxu0 %v436
    %v540 = vpop.f32.mrb[0].mxu0
    %v541 = vadd.f32 %v402, %v540
    %v542 = vpop.f32.mrb[0].mxu0
    %v543 = vadd.f32 %v406, %v542
    %544 = vmatprep.mubr.f32.mxu0 0.0
    %545 = vmatmul.mubr.f32.gmra.mrb[0].mxu0 %v439
    %v546 = vpop.f32.mrb[0].mxu0
    %v547 = vadd.f32 %v402, %v546
    %v548 = vpop.f32.mrb[0].mxu0
    %v549 = vadd.f32 %v406, %v548
    %550 = vmatprep.mubr.f32.mxu0 0.0
    %551 = vmatmul.mubr.f32.gmra.mrb[0].mxu0 %v442
    %v552 = vpop.f32.mrb[0].mxu0
    %v553 = vadd.f32 %v402, %v552
    %v554 = vpop.f32.mrb[0].mxu0
    %v555 = vadd.f32 %v406, %v554
    %556 = vdwg.mxu0
    %557 = vmatprep.subr.mxu0 %v392
    %558 = vmatpush1.msra.mxu0 %v391
    %559 = vmatprep.subr.mxu0 %v396
    %560 = vmatpush1.msra.mxu0 %v395
    %561 = vmatprep.subr.mxu0 0.0
    %562 = vmatpush1.msra.mxu0 0.0
    %563 = vmatprep.subr.mxu0 0.0
    %564 = vmatpush1.msra.mxu0 0.0
    %565 = vmatprep.subr.mxu0 0.0
    %566 = vmatpush1.msra.mxu0 0.0
    %567 = vmatprep.subr.mxu0 0.0
    %568 = vmatpush1.msra.mxu0 0.0
    %569 = vmatprep.subr.mxu0 0.0
    %570 = vmatpush1.msra.mxu0 0.0
    %571 = vmatprep.subr.mxu0 0.0
    %572 = vmatpush1.msra.mxu0 0.0
    %573 = vmatprep.subr.mxu0 0.0
    %574 = vmatpush1.msra.mxu0 0.0
    %575 = vmatprep.subr.mxu0 0.0
    %576 = vmatpush1.msra.mxu0 0.0
    %577 = vmatprep.subr.mxu0 0.0
    %578 = vmatpush1.msra.mxu0 0.0
    %579 = vmatprep.subr.mxu0 0.0
    %580 = vmatpush1.msra.mxu0 0.0
    %581 = vmatprep.subr.mxu0 0.0
    %582 = vmatpush1.msra.mxu0 0.0
    %583 = vmatprep.subr.mxu0 0.0
    %584 = vmatpush1.msra.mxu0 0.0
    %585 = vmatprep.subr.mxu0 0.0
    %586 = vmatpush1.msra.mxu0 0.0
    %587 = vmatprep.subr.mxu0 0.0
    %588 = vmatpush1.msra.mxu0 0.0
    %589 = vmatprep.subr.mxu0 0.0
    %590 = vmatpush1.msra.mxu0 0.0
    %591 = vmatprep.subr.mxu0 0.0
    %592 = vmatpush1.msra.mxu0 0.0
    %593 = vmatprep.subr.mxu0 0.0
    %594 = vmatpush1.msra.mxu0 0.0
    %595 = vmatprep.subr.mxu0 0.0
    %596 = vmatpush1.msra.mxu0 0.0
    %597 = vmatprep.subr.mxu0 0.0
    %598 = vmatpush1.msra.mxu0 0.0
    %599 = vmatprep.subr.mxu0 0.0
    %600 = vmatpush1.msra.mxu0 0.0
    %601 = vmatprep.subr.mxu0 0.0
    %602 = vmatpush1.msra.mxu0 0.0
    %603 = vmatprep.subr.mxu0 0.0
    %604 = vmatpush1.msra.mxu0 0.0
    %605 = vmatprep.subr.mxu0 0.0
    %606 = vmatpush1.msra.mxu0 0.0
    %607 = vmatprep.subr.mxu0 0.0
    %608 = vmatpush1.msra.mxu0 0.0
    %609 = vmatprep.subr.mxu0 0.0
    %610 = vmatpush1.msra.mxu0 0.0
    %611 = vmatprep.subr.mxu0 0.0
    %612 = vmatpush1.msra.mxu0 0.0
    %613 = vmatprep.subr.mxu0 0.0
    %614 = vmatpush1.msra.mxu0 0.0
    %615 = vmatprep.subr.mxu0 0.0
    %616 = vmatpush1.msra.mxu0 0.0
    %617 = vmatprep.subr.mxu0 0.0
    %618 = vmatpush1.msra.mxu0 0.0
    %619 = vmatprep.subr.mxu0 0.0
    %620 = vmatpush1.msra.mxu0 0.0
    %621 = vmatprep.mubr.f32.mxu0 0.0
    %622 = vmatmul.mubr.f32.gmra.mrb[0].mxu0 %v421
    %v623 = vpop.f32.mrb[0].mxu0
    %v624 = vadd.f32 %v410, %v623
    %v625 = vpop.f32.mrb[0].mxu0
    %v626 = vadd.f32 %v414, %v625
    %627 = vmatprep.mubr.f32.mxu0 0.0
    %628 = vmatmul.mubr.f32.gmra.mrb[0].mxu0 %v424
    %v629 = vpop.f32.mrb[0].mxu0
    %v630 = vadd.f32 %v410, %v629
    %v631 = vpop.f32.mrb[0].mxu0
    %v632 = vadd.f32 %v414, %v631
    %633 = vmatprep.mubr.f32.mxu0 0.0
    %634 = vmatmul.mubr.f32.gmra.mrb[0].mxu0 %v427
    %v635 = vpop.f32.mrb[0].mxu0
    %v636 = vadd.f32 %v410, %v635
    %v637 = vpop.f32.mrb[0].mxu0
    %v638 = vadd.f32 %v414, %v637
    %639 = vmatprep.mubr.f32.mxu0 0.0
    %640 = vmatmul.mubr.f32.gmra.mrb[0].mxu0 %v430
    %v641 = vpop.f32.mrb[0].mxu0
    %v642 = vadd.f32 %v410, %v641
    %v643 = vpop.f32.mrb[0].mxu0
    %v644 = vadd.f32 %v414, %v643
    %645 = vmatprep.mubr.f32.mxu0 0.0
    %646 = vmatmul.mubr.f32.gmra.mrb[0].mxu0 %v433
    %v647 = vpop.f32.mrb[0].mxu0
    %v648 = vadd.f32 %v410, %v647
    %v649 = vpop.f32.mrb[0].mxu0
    %v650 = vadd.f32 %v414, %v649
    %651 = vmatprep.mubr.f32.mxu0 0.0
    %652 = vmatmul.mubr.f32.gmra.mrb[0].mxu0 %v436
    %v653 = vpop.f32.mrb[0].mxu0
    %v654 = vadd.f32 %v410, %v653
    %v655 = vpop.f32.mrb[0].mxu0
    %v656 = vadd.f32 %v414, %v655
    %657 = vmatprep.mubr.f32.mxu0 0.0
    %658 = vmatmul.mubr.f32.gmra.mrb[0].mxu0 %v439
    %v659 = vpop.f32.mrb[0].mxu0
    %v660 = vadd.f32 %v410, %v659
    %v661 = vpop.f32.mrb[0].mxu0
    %v662 = vadd.f32 %v414, %v661
    %663 = vmatprep.mubr.f32.mxu0 0.0
    %664 = vmatmul.mubr.f32.gmra.mrb[0].mxu0 %v442
    %v665 = vpop.f32.mrb[0].mxu0
    %v666 = vadd.f32 %v410, %v665
    %v667 = vpop.f32.mrb[0].mxu0
    %v668 = vadd.f32 %v414, %v667
    %669 = vdwg.mxu0
    %670 = vst [vmem:[#allocation2] sm:$0xff] %v511
    %671 = vst [vmem:[#allocation2 + $0x8] sm:$0xff] %v513
    %672 = vst [vmem:[#allocation2 + $0x10] sm:$0xff] %v624
    %673 = vst [vmem:[#allocation2 + $0x18] sm:$0xff] %v626
    %674 = vst [vmem:[#allocation2 + $0x20] sm:$0xff] %v517
    %675 = vst [vmem:[#allocation2 + $0x28] sm:$0xff] %v519
    %676 = vst [vmem:[#allocation2 + $0x30] sm:$0xff] %v630
    %677 = vst [vmem:[#allocation2 + $0x38] sm:$0xff] %v632
    %678 = vst [vmem:[#allocation2 + $0x40] sm:$0xff] %v523
    %679 = vst [vmem:[#allocation2 + $0x48] sm:$0xff] %v525
    %680 = vst [vmem:[#allocation2 + $0x50] sm:$0xff] %v636
    %681 = vst [vmem:[#allocation2 + $0x58] sm:$0xff] %v638
    %682 = vst [vmem:[#allocation2 + $0x60] sm:$0xff] %v529
    %683 = vst [vmem:[#allocation2 + $0x68] sm:$0xff] %v531
    %684 = vst [vmem:[#allocation2 + $0x70] sm:$0xff] %v642
    %685 = vst [vmem:[#allocation2 + $0x78] sm:$0xff] %v644
    %686 = vst [vmem:[#allocation2 + $0x80] sm:$0xff] %v535
    %687 = vst [vmem:[#allocation2 + $0x88] sm:$0xff] %v537
    %688 = vst [vmem:[#allocation2 + $0x90] sm:$0xff] %v648
    %689 = vst [vmem:[#allocation2 + $0x98] sm:$0xff] %v650
    %690 = vst [vmem:[#allocation2 + $0xa0] sm:$0xff] %v541
    %691 = vst [vmem:[#allocation2 + $0xa8] sm:$0xff] %v543
    %692 = vst [vmem:[#allocation2 + $0xb0] sm:$0xff] %v654
    %693 = vst [vmem:[#allocation2 + $0xb8] sm:$0xff] %v656
    %694 = vst [vmem:[#allocation2 + $0xc0] sm:$0xff] %v547
    %695 = vst [vmem:[#allocation2 + $0xc8] sm:$0xff] %v549
    %696 = vst [vmem:[#allocation2 + $0xd0] sm:$0xff] %v660
    %697 = vst [vmem:[#allocation2 + $0xd8] sm:$0xff] %v662
    %698 = vst [vmem:[#allocation2 + $0xe0] sm:$0xff] %v553
    %699 = vst [vmem:[#allocation2 + $0xe8] sm:$0xff] %v555
    %700 = vst [vmem:[#allocation2 + $0xf0] sm:$0xff] %v666
    %701 = vst [vmem:[#allocation2 + $0xf8] sm:$0xff] %v668
    %v702 = vld [vmem:[#allocation2] sm:$0xff]
    %v703 = vld [vmem:[#allocation2 + $0x8] sm:$0xff]
    %v704 = vld [vmem:[#allocation2 + $0x10] sm:$0xff]
    %v705 = vld [vmem:[#allocation2 + $0x18] sm:$0xff]
    %v706 = vld [vmem:[#allocation3] sm:$0xff]
    %v707 = vld [vmem:[#allocation3 + $0x8] sm:$0xff]
    %v708 = vld [vmem:[#allocation3 + $0x10] sm:$0xff]
    %v709 = vld [vmem:[#allocation3 + $0x18] sm:$0xff]
    %v710 = vld [vmem:[#allocation3 + $0x20] sm:$0xff]
    %v711 = vld [vmem:[#allocation3 + $0x28] sm:$0xff]
    %v712 = vld [vmem:[#allocation3 + $0x30] sm:$0xff]
    %v713 = vld [vmem:[#allocation3 + $0x38] sm:$0xff]
    %v714 = vld [vmem:[#allocation3 + $0x40] sm:$0xff]
    %v715 = vld [vmem:[#allocation3 + $0x48] sm:$0xff]
    %v716 = vld [vmem:[#allocation3 + $0x50] sm:$0xff]
    %v717 = vld [vmem:[#allocation3 + $0x58] sm:$0xff]
    %v718 = vld [vmem:[#allocation3 + $0x60] sm:$0xff]
    %v719 = vld [vmem:[#allocation3 + $0x68] sm:$0xff]
    %v720 = vld [vmem:[#allocation3 + $0x70] sm:$0xff]
    %v721 = vld [vmem:[#allocation3 + $0x78] sm:$0xff]
    %v722 = vld [vmem:[#allocation3 + $0x80] sm:$0xff]
    %v723 = vld [vmem:[#allocation3 + $0x88] sm:$0xff]
    %v724 = vld [vmem:[#allocation3 + $0x90] sm:$0xff]
    %v725 = vld [vmem:[#allocation3 + $0x98] sm:$0xff]
    %v726 = vld [vmem:[#allocation3 + $0xa0] sm:$0xff]
    %v727 = vld [vmem:[#allocation3 + $0xa8] sm:$0xff]
    %v728 = vld [vmem:[#allocation3 + $0xb0] sm:$0xff]
    %v729 = vld [vmem:[#allocation3 + $0xb8] sm:$0xff]
    %v730 = vld [vmem:[#allocation3 + $0xc0] sm:$0xff]
    %v731 = vld [vmem:[#allocation3 + $0xc8] sm:$0xff]
    %v732 = vld [vmem:[#allocation3 + $0xd0] sm:$0xff]
    %v733 = vld [vmem:[#allocation3 + $0xd8] sm:$0xff]
    %v734 = vld [vmem:[#allocation3 + $0xe0] sm:$0xff]
    %v735 = vld [vmem:[#allocation3 + $0xe8] sm:$0xff]
    %v736 = vld [vmem:[#allocation3 + $0xf0] sm:$0xff]
    %v737 = vld [vmem:[#allocation3 + $0xf8] sm:$0xff]
    %v738 = vld [vmem:[#allocation3 + $0x100] sm:$0xff]
    %v739 = vld [vmem:[#allocation3 + $0x108] sm:$0xff]
    %v740 = vld [vmem:[#allocation3 + $0x110] sm:$0xff]
    %v741 = vld [vmem:[#allocation3 + $0x118] sm:$0xff]
    %v742 = vld [vmem:[#allocation3 + $0x120] sm:$0xff]
    %v743 = vld [vmem:[#allocation3 + $0x128] sm:$0xff]
    %v744 = vld [vmem:[#allocation3 + $0x130] sm:$0xff]
    %v745 = vld [vmem:[#allocation3 + $0x138] sm:$0xff]
    %v746 = vld [vmem:[#allocation3 + $0x140] sm:$0xff]
    %v747 = vld [vmem:[#allocation3 + $0x148] sm:$0xff]
    %v748 = vld [vmem:[#allocation3 + $0x150] sm:$0xff]
    %v749 = vld [vmem:[#allocation3 + $0x158] sm:$0xff]
    %v750 = vld [vmem:[#allocation3 + $0x160] sm:$0xff]
    %v751 = vld [vmem:[#allocation3 + $0x168] sm:$0xff]
    %v752 = vld [vmem:[#allocation3 + $0x170] sm:$0xff]
    %v753 = vld [vmem:[#allocation3 + $0x178] sm:$0xff]
    %v754 = vld [vmem:[#allocation3 + $0x180] sm:$0xff]
    %v755 = vld [vmem:[#allocation3 + $0x188] sm:$0xff]
    %v756 = vld [vmem:[#allocation3 + $0x190] sm:$0xff]
    %v757 = vld [vmem:[#allocation3 + $0x198] sm:$0xff]
    %v758 = vld [vmem:[#allocation3 + $0x1a0] sm:$0xff]
    %v759 = vld [vmem:[#allocation3 + $0x1a8] sm:$0xff]
    %v760 = vld [vmem:[#allocation3 + $0x1b0] sm:$0xff]
    %v761 = vld [vmem:[#allocation3 + $0x1b8] sm:$0xff]
    %v762 = vld [vmem:[#allocation3 + $0x1c0] sm:$0xff]
    %v763 = vld [vmem:[#allocation3 + $0x1c8] sm:$0xff]
    %v764 = vld [vmem:[#allocation3 + $0x1d0] sm:$0xff]
    %v765 = vld [vmem:[#allocation3 + $0x1d8] sm:$0xff]
    %v766 = vld [vmem:[#allocation3 + $0x1e0] sm:$0xff]
    %v767 = vld [vmem:[#allocation3 + $0x1e8] sm:$0xff]
    %v768 = vld [vmem:[#allocation3 + $0x1f0] sm:$0xff]
    %v769 = vld [vmem:[#allocation3 + $0x1f8] sm:$0xff]
    %770 = vmatprep.subr.mxu0 %v707
    %771 = vmatpush1.msra.mxu0 %v706
    %772 = vmatprep.subr.mxu0 %v711
    %773 = vmatpush1.msra.mxu0 %v710
    %774 = vmatprep.subr.mxu0 %v715
    %775 = vmatpush1.msra.mxu0 %v714
    %776 = vmatprep.subr.mxu0 %v719
    %777 = vmatpush1.msra.mxu0 %v718
    %778 = vmatprep.subr.mxu0 %v723
    %779 = vmatpush1.msra.mxu0 %v722
    %780 = vmatprep.subr.mxu0 %v727
    %781 = vmatpush1.msra.mxu0 %v726
    %782 = vmatprep.subr.mxu0 %v731
    %783 = vmatpush1.msra.mxu0 %v730
    %784 = vmatprep.subr.mxu0 %v735
    %785 = vmatpush1.msra.mxu0 %v734
    %786 = vmatprep.subr.mxu0 %v739
    %787 = vmatpush1.msra.mxu0 %v738
    %788 = vmatprep.subr.mxu0 %v743
    %789 = vmatpush1.msra.mxu0 %v742
    %790 = vmatprep.subr.mxu0 %v747
    %791 = vmatpush1.msra.mxu0 %v746
    %792 = vmatprep.subr.mxu0 %v751
    %793 = vmatpush1.msra.mxu0 %v750
    %794 = vmatprep.subr.mxu0 %v755
    %795 = vmatpush1.msra.mxu0 %v754
    %796 = vmatprep.subr.mxu0 %v759
    %797 = vmatpush1.msra.mxu0 %v758
    %798 = vmatprep.subr.mxu0 %v763
    %799 = vmatpush1.msra.mxu0 %v762
    %800 = vmatprep.subr.mxu0 %v767
    %801 = vmatpush1.msra.mxu0 %v766
    %802 = vmatprep.subr.mxu0 0.0
    %803 = vmatpush1.msra.mxu0 0.0
    %804 = vmatprep.subr.mxu0 0.0
    %805 = vmatpush1.msra.mxu0 0.0
    %806 = vmatprep.subr.mxu0 0.0
    %807 = vmatpush1.msra.mxu0 0.0
    %808 = vmatprep.subr.mxu0 0.0
    %809 = vmatpush1.msra.mxu0 0.0
    %810 = vmatprep.subr.mxu0 0.0
    %811 = vmatpush1.msra.mxu0 0.0
    %812 = vmatprep.subr.mxu0 0.0
    %813 = vmatpush1.msra.mxu0 0.0
    %814 = vmatprep.subr.mxu0 0.0
    %815 = vmatpush1.msra.mxu0 0.0
    %816 = vmatprep.subr.mxu0 0.0
    %817 = vmatpush1.msra.mxu0 0.0
    %818 = vmatprep.subr.mxu0 0.0
    %819 = vmatpush1.msra.mxu0 0.0
    %820 = vmatprep.subr.mxu0 0.0
    %821 = vmatpush1.msra.mxu0 0.0
    %822 = vmatprep.subr.mxu0 0.0
    %823 = vmatpush1.msra.mxu0 0.0
    %824 = vmatprep.subr.mxu0 0.0
    %825 = vmatpush1.msra.mxu0 0.0
    %826 = vmatprep.subr.mxu0 0.0
    %827 = vmatpush1.msra.mxu0 0.0
    %828 = vmatprep.subr.mxu0 0.0
    %829 = vmatpush1.msra.mxu0 0.0
    %830 = vmatprep.subr.mxu0 0.0
    %831 = vmatpush1.msra.mxu0 0.0
    %832 = vmatprep.subr.mxu0 0.0
    %833 = vmatpush1.msra.mxu0 0.0
    %834 = vmatprep.mubr.f32.mxu0 0.0
    %835 = vmatmul.mubr.f32.gmra.mrb[0].mxu0 0.0
    %v836 = vpop.f32.mrb[0].mxu0
    %v837 = vadd.f32 0.0, %v836
    %v838 = vpop.f32.mrb[0].mxu0
    %v839 = vadd.f32 0.0, %v838
    %840 = vdwg.mxu0
    %841 = vmatprep.subr.mxu0 %v709
    %842 = vmatpush1.msra.mxu0 %v708
    %843 = vmatprep.subr.mxu0 %v713
    %844 = vmatpush1.msra.mxu0 %v712
    %845 = vmatprep.subr.mxu0 %v717
    %846 = vmatpush1.msra.mxu0 %v716
    %847 = vmatprep.subr.mxu0 %v721
    %848 = vmatpush1.msra.mxu0 %v720
    %849 = vmatprep.subr.mxu0 %v725
    %850 = vmatpush1.msra.mxu0 %v724
    %851 = vmatprep.subr.mxu0 %v729
    %852 = vmatpush1.msra.mxu0 %v728
    %853 = vmatprep.subr.mxu0 %v733
    %854 = vmatpush1.msra.mxu0 %v732
    %855 = vmatprep.subr.mxu0 %v737
    %856 = vmatpush1.msra.mxu0 %v736
    %857 = vmatprep.subr.mxu0 %v741
    %858 = vmatpush1.msra.mxu0 %v740
    %859 = vmatprep.subr.mxu0 %v745
    %860 = vmatpush1.msra.mxu0 %v744
    %861 = vmatprep.subr.mxu0 %v749
    %862 = vmatpush1.msra.mxu0 %v748
    %863 = vmatprep.subr.mxu0 %v753
    %864 = vmatpush1.msra.mxu0 %v752
    %865 = vmatprep.subr.mxu0 %v757
    %866 = vmatpush1.msra.mxu0 %v756
    %867 = vmatprep.subr.mxu0 %v761
    %868 = vmatpush1.msra.mxu0 %v760
    %869 = vmatprep.subr.mxu0 %v765
    %870 = vmatpush1.msra.mxu0 %v764
    %871 = vmatprep.subr.mxu0 %v769
    %872 = vmatpush1.msra.mxu0 %v768
    %873 = vmatprep.subr.mxu0 0.0
    %874 = vmatpush1.msra.mxu0 0.0
    %875 = vmatprep.subr.mxu0 0.0
    %876 = vmatpush1.msra.mxu0 0.0
    %877 = vmatprep.subr.mxu0 0.0
    %878 = vmatpush1.msra.mxu0 0.0
    %879 = vmatprep.subr.mxu0 0.0
    %880 = vmatpush1.msra.mxu0 0.0
    %881 = vmatprep.subr.mxu0 0.0
    %882 = vmatpush1.msra.mxu0 0.0
    %883 = vmatprep.subr.mxu0 0.0
    %884 = vmatpush1.msra.mxu0 0.0
    %885 = vmatprep.subr.mxu0 0.0
    %886 = vmatpush1.msra.mxu0 0.0
    %887 = vmatprep.subr.mxu0 0.0
    %888 = vmatpush1.msra.mxu0 0.0
    %889 = vmatprep.subr.mxu0 0.0
    %890 = vmatpush1.msra.mxu0 0.0
    %891 = vmatprep.subr.mxu0 0.0
    %892 = vmatpush1.msra.mxu0 0.0
    %893 = vmatprep.subr.mxu0 0.0
    %894 = vmatpush1.msra.mxu0 0.0
    %895 = vmatprep.subr.mxu0 0.0
    %896 = vmatpush1.msra.mxu0 0.0
    %897 = vmatprep.subr.mxu0 0.0
    %898 = vmatpush1.msra.mxu0 0.0
    %899 = vmatprep.subr.mxu0 0.0
    %900 = vmatpush1.msra.mxu0 0.0
    %901 = vmatprep.subr.mxu0 0.0
    %902 = vmatpush1.msra.mxu0 0.0
    %903 = vmatprep.subr.mxu0 0.0
    %904 = vmatpush1.msra.mxu0 0.0
    %905 = vmatprep.mubr.f32.mxu0 0.0
    %906 = vmatmul.mubr.f32.gmra.mrb[0].mxu0 0.0
    %v907 = vpop.f32.mrb[0].mxu0
    %v908 = vadd.f32 0.0, %v907
    %v909 = vpop.f32.mrb[0].mxu0
    %v910 = vadd.f32 0.0, %v909
    %911 = vdwg.mxu0
    %v912 = vadd.f32 %v702, %v837
    %v913 = vadd.f32 %v703, %v839
    %v914 = vadd.f32 %v704, %v908
    %v915 = vadd.f32 %v705, %v910
    %v916 = vxor.u32 %v912, 2147483648
    %v917 = vxor.u32 %v913, 2147483648
    %v918 = vxor.u32 %v914, 2147483648
    %v919 = vmul.f32 %v916, 1.442695
    %v920 = vpow.pop %v919
    %v921 = vmul.f32 %v917, 1.442695
    %v922 = vpow.pop %v921
    %v923 = vmul.f32 %v918, 1.442695
    %v924 = vpow.pop %v923
    %v925 = vadd.f32 %v920, 1.0
    %v926 = vadd.f32 %v922, 1.0
    %v927 = vadd.f32 %v924, 1.0
    %v928 = vrcp.pop %v925
    %v929 = vmul.f32 1.0, %v928
    %v930 = vrcp.pop %v926
    %v931 = vmul.f32 1.0, %v930
    %v932 = vrcp.pop %v927
    %v933 = vmul.f32 1.0, %v932
    %v934 = vtanh.pop %v915
    %v935 = vmul.f32 %v931, 0.0
    %v936 = vmul.f32 %v929, %v934
    %v937 = vadd.f32 %v935, %v936
    %v938 = vtanh.pop %v937
    %v939 = vmul.f32 %v933, %v938
    %v940 = vld [vmem:[#allocation2 + $0x20] sm:$0xff]
    %v941 = vld [vmem:[#allocation2 + $0x28] sm:$0xff]
    %v942 = vld [vmem:[#allocation2 + $0x30] sm:$0xff]
    %v943 = vld [vmem:[#allocation2 + $0x38] sm:$0xff]
    %944 = vmatprep.subr.mxu0 %v707
    %945 = vmatpush1.msra.mxu0 %v706
    %946 = vmatprep.subr.mxu0 %v711
    %947 = vmatpush1.msra.mxu0 %v710
    %948 = vmatprep.subr.mxu0 %v715
    %949 = vmatpush1.msra.mxu0 %v714
    %950 = vmatprep.subr.mxu0 %v719
    %951 = vmatpush1.msra.mxu0 %v718
    %952 = vmatprep.subr.mxu0 %v723
    %953 = vmatpush1.msra.mxu0 %v722
    %954 = vmatprep.subr.mxu0 %v727
    %955 = vmatpush1.msra.mxu0 %v726
    %956 = vmatprep.subr.mxu0 %v731
    %957 = vmatpush1.msra.mxu0 %v730
    %958 = vmatprep.subr.mxu0 %v735
    %959 = vmatpush1.msra.mxu0 %v734
    %960 = vmatprep.subr.mxu0 %v739
    %961 = vmatpush1.msra.mxu0 %v738
    %962 = vmatprep.subr.mxu0 %v743
    %963 = vmatpush1.msra.mxu0 %v742
    %964 = vmatprep.subr.mxu0 %v747
    %965 = vmatpush1.msra.mxu0 %v746
    %966 = vmatprep.subr.mxu0 %v751
    %967 = vmatpush1.msra.mxu0 %v750
    %968 = vmatprep.subr.mxu0 %v755
    %969 = vmatpush1.msra.mxu0 %v754
    %970 = vmatprep.subr.mxu0 %v759
    %971 = vmatpush1.msra.mxu0 %v758
    %972 = vmatprep.subr.mxu0 %v763
    %973 = vmatpush1.msra.mxu0 %v762
    %974 = vmatprep.subr.mxu0 %v767
    %975 = vmatpush1.msra.mxu0 %v766
    %976 = vmatprep.subr.mxu0 0.0
    %977 = vmatpush1.msra.mxu0 0.0
    %978 = vmatprep.subr.mxu0 0.0
    %979 = vmatpush1.msra.mxu0 0.0
    %980 = vmatprep.subr.mxu0 0.0
    %981 = vmatpush1.msra.mxu0 0.0
    %982 = vmatprep.subr.mxu0 0.0
    %983 = vmatpush1.msra.mxu0 0.0
    %984 = vmatprep.subr.mxu0 0.0
    %985 = vmatpush1.msra.mxu0 0.0
    %986 = vmatprep.subr.mxu0 0.0
    %987 = vmatpush1.msra.mxu0 0.0
    %988 = vmatprep.subr.mxu0 0.0
    %989 = vmatpush1.msra.mxu0 0.0
    %990 = vmatprep.subr.mxu0 0.0
    %991 = vmatpush1.msra.mxu0 0.0
    %992 = vmatprep.subr.mxu0 0.0
    %993 = vmatpush1.msra.mxu0 0.0
    %994 = vmatprep.subr.mxu0 0.0
    %995 = vmatpush1.msra.mxu0 0.0
    %996 = vmatprep.subr.mxu0 0.0
    %997 = vmatpush1.msra.mxu0 0.0
    %998 = vmatprep.subr.mxu0 0.0
    %999 = vmatpush1.msra.mxu0 0.0
    %1000 = vmatprep.subr.mxu0 0.0
    %1001 = vmatpush1.msra.mxu0 0.0
    %1002 = vmatprep.subr.mxu0 0.0
    %1003 = vmatpush1.msra.mxu0 0.0
    %1004 = vmatprep.subr.mxu0 0.0
    %1005 = vmatpush1.msra.mxu0 0.0
    %1006 = vmatprep.subr.mxu0 0.0
    %1007 = vmatpush1.msra.mxu0 0.0
    %1008 = vmatprep.mubr.f32.mxu0 0.0
    %1009 = vmatmul.mubr.f32.gmra.mrb[0].mxu0 %v939
    %v1010 = vpop.f32.mrb[0].mxu0
    %v1011 = vadd.f32 0.0, %v1010
    %v1012 = vpop.f32.mrb[0].mxu0
    %v1013 = vadd.f32 0.0, %v1012
    %1014 = vdwg.mxu0
    %1015 = vmatprep.subr.mxu0 %v709
    %1016 = vmatpush1.msra.mxu0 %v708
    %1017 = vmatprep.subr.mxu0 %v713
    %1018 = vmatpush1.msra.mxu0 %v712
    %1019 = vmatprep.subr.mxu0 %v717
    %1020 = vmatpush1.msra.mxu0 %v716
    %1021 = vmatprep.subr.mxu0 %v721
    %1022 = vmatpush1.msra.mxu0 %v720
    %1023 = vmatprep.subr.mxu0 %v725
    %1024 = vmatpush1.msra.mxu0 %v724
    %1025 = vmatprep.subr.mxu0 %v729
    %1026 = vmatpush1.msra.mxu0 %v728
    %1027 = vmatprep.subr.mxu0 %v733
    %1028 = vmatpush1.msra.mxu0 %v732
    %1029 = vmatprep.subr.mxu0 %v737
    %1030 = vmatpush1.msra.mxu0 %v736
    %1031 = vmatprep.subr.mxu0 %v741
    %1032 = vmatpush1.msra.mxu0 %v740
    %1033 = vmatprep.subr.mxu0 %v745
    %1034 = vmatpush1.msra.mxu0 %v744
    %1035 = vmatprep.subr.mxu0 %v749
    %1036 = vmatpush1.msra.mxu0 %v748
    %1037 = vmatprep.subr.mxu0 %v753
    %1038 = vmatpush1.msra.mxu0 %v752
    %1039 = vmatprep.subr.mxu0 %v757
    %1040 = vmatpush1.msra.mxu0 %v756
    %1041 = vmatprep.subr.mxu0 %v761
    %1042 = vmatpush1.msra.mxu0 %v760
    %1043 = vmatprep.subr.mxu0 %v765
    %1044 = vmatpush1.msra.mxu0 %v764
    %1045 = vmatprep.subr.mxu0 %v769
    %1046 = vmatpush1.msra.mxu0 %v768
    %1047 = vmatprep.subr.mxu0 0.0
    %1048 = vmatpush1.msra.mxu0 0.0
    %1049 = vmatprep.subr.mxu0 0.0
    %1050 = vmatpush1.msra.mxu0 0.0
    %1051 = vmatprep.subr.mxu0 0.0
    %1052 = vmatpush1.msra.mxu0 0.0
    %1053 = vmatprep.subr.mxu0 0.0
    %1054 = vmatpush1.msra.mxu0 0.0
    %1055 = vmatprep.subr.mxu0 0.0
    %1056 = vmatpush1.msra.mxu0 0.0
    %1057 = vmatprep.subr.mxu0 0.0
    %1058 = vmatpush1.msra.mxu0 0.0
    %1059 = vmatprep.subr.mxu0 0.0
    %1060 = vmatpush1.msra.mxu0 0.0
    %1061 = vmatprep.subr.mxu0 0.0
    %1062 = vmatpush1.msra.mxu0 0.0
    %1063 = vmatprep.subr.mxu0 0.0
    %1064 = vmatpush1.msra.mxu0 0.0
    %1065 = vmatprep.subr.mxu0 0.0
    %1066 = vmatpush1.msra.mxu0 0.0
    %1067 = vmatprep.subr.mxu0 0.0
    %1068 = vmatpush1.msra.mxu0 0.0
    %1069 = vmatprep.subr.mxu0 0.0
    %1070 = vmatpush1.msra.mxu0 0.0
    %1071 = vmatprep.subr.mxu0 0.0
    %1072 = vmatpush1.msra.mxu0 0.0
    %1073 = vmatprep.subr.mxu0 0.0
    %1074 = vmatpush1.msra.mxu0 0.0
    %1075 = vmatprep.subr.mxu0 0.0
    %1076 = vmatpush1.msra.mxu0 0.0
    %1077 = vmatprep.subr.mxu0 0.0
    %1078 = vmatpush1.msra.mxu0 0.0
    %1079 = vmatprep.mubr.f32.mxu0 0.0
    %1080 = vmatmul.mubr.f32.gmra.mrb[0].mxu0 %v939
    %v1081 = vpop.f32.mrb[0].mxu0
    %v1082 = vadd.f32 0.0, %v1081
    %v1083 = vpop.f32.mrb[0].mxu0
    %v1084 = vadd.f32 0.0, %v1083
    %1085 = vdwg.mxu0
    %v1086 = vadd.f32 %v940, %v1011
    %v1087 = vadd.f32 %v941, %v1013
    %v1088 = vadd.f32 %v942, %v1082
    %v1089 = vadd.f32 %v943, %v1084
    %v1090 = vxor.u32 %v1086, 2147483648
    %v1091 = vxor.u32 %v1087, 2147483648
    %v1092 = vxor.u32 %v1088, 2147483648
    %v1093 = vmul.f32 %v1090, 1.442695
    %v1094 = vpow.pop %v1093
    %v1095 = vmul.f32 %v1091, 1.442695
    %v1096 = vpow.pop %v1095
    %v1097 = vmul.f32 %v1092, 1.442695
    %v1098 = vpow.pop %v1097
    %v1099 = vadd.f32 %v1094, 1.0
    %v1100 = vadd.f32 %v1096, 1.0
    %v1101 = vadd.f32 %v1098, 1.0
    %v1102 = vrcp.pop %v1099
    %v1103 = vmul.f32 1.0, %v1102
    %v1104 = vrcp.pop %v1100
    %v1105 = vmul.f32 1.0, %v1104
    %v1106 = vrcp.pop %v1101
    %v1107 = vmul.f32 1.0, %v1106
    %v1108 = vtanh.pop %v1089
    %v1109 = vmul.f32 %v1105, %v937
    %v1110 = vmul.f32 %v1103, %v1108
    %v1111 = vadd.f32 %v1109, %v1110
    %v1112 = vtanh.pop %v1111
    %v1113 = vmul.f32 %v1107, %v1112
    %v1114 = vld [vmem:[#allocation2 + $0x40] sm:$0xff]
    %v1115 = vld [vmem:[#allocation2 + $0x48] sm:$0xff]
    %v1116 = vld [vmem:[#allocation2 + $0x50] sm:$0xff]
    %v1117 = vld [vmem:[#allocation2 + $0x58] sm:$0xff]
    %1118 = vmatprep.subr.mxu0 %v707
    %1119 = vmatpush1.msra.mxu0 %v706
    %1120 = vmatprep.subr.mxu0 %v711
    %1121 = vmatpush1.msra.mxu0 %v710
    %1122 = vmatprep.subr.mxu0 %v715
    %1123 = vmatpush1.msra.mxu0 %v714
    %1124 = vmatprep.subr.mxu0 %v719
    %1125 = vmatpush1.msra.mxu0 %v718
    %1126 = vmatprep.subr.mxu0 %v723
    %1127 = vmatpush1.msra.mxu0 %v722
    %1128 = vmatprep.subr.mxu0 %v727
    %1129 = vmatpush1.msra.mxu0 %v726
    %1130 = vmatprep.subr.mxu0 %v731
    %1131 = vmatpush1.msra.mxu0 %v730
    %1132 = vmatprep.subr.mxu0 %v735
    %1133 = vmatpush1.msra.mxu0 %v734
    %1134 = vmatprep.subr.mxu0 %v739
    %1135 = vmatpush1.msra.mxu0 %v738
    %1136 = vmatprep.subr.mxu0 %v743
    %1137 = vmatpush1.msra.mxu0 %v742
    %1138 = vmatprep.subr.mxu0 %v747
    %1139 = vmatpush1.msra.mxu0 %v746
    %1140 = vmatprep.subr.mxu0 %v751
    %1141 = vmatpush1.msra.mxu0 %v750
    %1142 = vmatprep.subr.mxu0 %v755
    %1143 = vmatpush1.msra.mxu0 %v754
    %1144 = vmatprep.subr.mxu0 %v759
    %1145 = vmatpush1.msra.mxu0 %v758
    %1146 = vmatprep.subr.mxu0 %v763
    %1147 = vmatpush1.msra.mxu0 %v762
    %1148 = vmatprep.subr.mxu0 %v767
    %1149 = vmatpush1.msra.mxu0 %v766
    %1150 = vmatprep.subr.mxu0 0.0
    %1151 = vmatpush1.msra.mxu0 0.0
    %1152 = vmatprep.subr.mxu0 0.0
    %1153 = vmatpush1.msra.mxu0 0.0
    %1154 = vmatprep.subr.mxu0 0.0
    %1155 = vmatpush1.msra.mxu0 0.0
    %1156 = vmatprep.subr.mxu0 0.0
    %1157 = vmatpush1.msra.mxu0 0.0
    %1158 = vmatprep.subr.mxu0 0.0
    %1159 = vmatpush1.msra.mxu0 0.0
    %1160 = vmatprep.subr.mxu0 0.0
    %1161 = vmatpush1.msra.mxu0 0.0
    %1162 = vmatprep.subr.mxu0 0.0
    %1163 = vmatpush1.msra.mxu0 0.0
    %1164 = vmatprep.subr.mxu0 0.0
    %1165 = vmatpush1.msra.mxu0 0.0
    %1166 = vmatprep.subr.mxu0 0.0
    %1167 = vmatpush1.msra.mxu0 0.0
    %1168 = vmatprep.subr.mxu0 0.0
    %1169 = vmatpush1.msra.mxu0 0.0
    %1170 = vmatprep.subr.mxu0 0.0
    %1171 = vmatpush1.msra.mxu0 0.0
    %1172 = vmatprep.subr.mxu0 0.0
    %1173 = vmatpush1.msra.mxu0 0.0
    %1174 = vmatprep.subr.mxu0 0.0
    %1175 = vmatpush1.msra.mxu0 0.0
    %1176 = vmatprep.subr.mxu0 0.0
    %1177 = vmatpush1.msra.mxu0 0.0
    %1178 = vmatprep.subr.mxu0 0.0
    %1179 = vmatpush1.msra.mxu0 0.0
    %1180 = vmatprep.subr.mxu0 0.0
    %1181 = vmatpush1.msra.mxu0 0.0
    %1182 = vmatprep.mubr.f32.mxu0 0.0
    %1183 = vmatmul.mubr.f32.gmra.mrb[0].mxu0 %v1113
    %v1184 = vpop.f32.mrb[0].mxu0
    %v1185 = vadd.f32 0.0, %v1184
    %v1186 = vpop.f32.mrb[0].mxu0
    %v1187 = vadd.f32 0.0, %v1186
    %1188 = vdwg.mxu0
    %1189 = vmatprep.subr.mxu0 %v709
    %1190 = vmatpush1.msra.mxu0 %v708
    %1191 = vmatprep.subr.mxu0 %v713
    %1192 = vmatpush1.msra.mxu0 %v712
    %1193 = vmatprep.subr.mxu0 %v717
    %1194 = vmatpush1.msra.mxu0 %v716
    %1195 = vmatprep.subr.mxu0 %v721
    %1196 = vmatpush1.msra.mxu0 %v720
    %1197 = vmatprep.subr.mxu0 %v725
    %1198 = vmatpush1.msra.mxu0 %v724
    %1199 = vmatprep.subr.mxu0 %v729
    %1200 = vmatpush1.msra.mxu0 %v728
    %1201 = vmatprep.subr.mxu0 %v733
    %1202 = vmatpush1.msra.mxu0 %v732
    %1203 = vmatprep.subr.mxu0 %v737
    %1204 = vmatpush1.msra.mxu0 %v736
    %1205 = vmatprep.subr.mxu0 %v741
    %1206 = vmatpush1.msra.mxu0 %v740
    %1207 = vmatprep.subr.mxu0 %v745
    %1208 = vmatpush1.msra.mxu0 %v744
    %1209 = vmatprep.subr.mxu0 %v749
    %1210 = vmatpush1.msra.mxu0 %v748
    %1211 = vmatprep.subr.mxu0 %v753
    %1212 = vmatpush1.msra.mxu0 %v752
    %1213 = vmatprep.subr.mxu0 %v757
    %1214 = vmatpush1.msra.mxu0 %v756
    %1215 = vmatprep.subr.mxu0 %v761
    %1216 = vmatpush1.msra.mxu0 %v760
    %1217 = vmatprep.subr.mxu0 %v765
    %1218 = vmatpush1.msra.mxu0 %v764
    %1219 = vmatprep.subr.mxu0 %v769
    %1220 = vmatpush1.msra.mxu0 %v768
    %1221 = vmatprep.subr.mxu0 0.0
    %1222 = vmatpush1.msra.mxu0 0.0
    %1223 = vmatprep.subr.mxu0 0.0
    %1224 = vmatpush1.msra.mxu0 0.0
    %1225 = vmatprep.subr.mxu0 0.0
    %1226 = vmatpush1.msra.mxu0 0.0
    %1227 = vmatprep.subr.mxu0 0.0
    %1228 = vmatpush1.msra.mxu0 0.0
    %1229 = vmatprep.subr.mxu0 0.0
    %1230 = vmatpush1.msra.mxu0 0.0
    %1231 = vmatprep.subr.mxu0 0.0
    %1232 = vmatpush1.msra.mxu0 0.0
    %1233 = vmatprep.subr.mxu0 0.0
    %1234 = vmatpush1.msra.mxu0 0.0
    %1235 = vmatprep.subr.mxu0 0.0
    %1236 = vmatpush1.msra.mxu0 0.0
    %1237 = vmatprep.subr.mxu0 0.0
    %1238 = vmatpush1.msra.mxu0 0.0
    %1239 = vmatprep.subr.mxu0 0.0
    %1240 = vmatpush1.msra.mxu0 0.0
    %1241 = vmatprep.subr.mxu0 0.0
    %1242 = vmatpush1.msra.mxu0 0.0
    %1243 = vmatprep.subr.mxu0 0.0
    %1244 = vmatpush1.msra.mxu0 0.0
    %1245 = vmatprep.subr.mxu0 0.0
    %1246 = vmatpush1.msra.mxu0 0.0
    %1247 = vmatprep.subr.mxu0 0.0
    %1248 = vmatpush1.msra.mxu0 0.0
    %1249 = vmatprep.subr.mxu0 0.0
    %1250 = vmatpush1.msra.mxu0 0.0
    %1251 = vmatprep.subr.mxu0 0.0
    %1252 = vmatpush1.msra.mxu0 0.0
    %1253 = vmatprep.mubr.f32.mxu0 0.0
    %1254 = vmatmul.mubr.f32.gmra.mrb[0].mxu0 %v1113
    %v1255 = vpop.f32.mrb[0].mxu0
    %v1256 = vadd.f32 0.0, %v1255
    %v1257 = vpop.f32.mrb[0].mxu0
    %v1258 = vadd.f32 0.0, %v1257
    %1259 = vdwg.mxu0
    %v1260 = vadd.f32 %v1114, %v1185
    %v1261 = vadd.f32 %v1115, %v1187
    %v1262 = vadd.f32 %v1116, %v1256
    %v1263 = vadd.f32 %v1117, %v1258
    %v1264 = vxor.u32 %v1260, 2147483648
    %v1265 = vxor.u32 %v1261, 2147483648
    %v1266 = vxor.u32 %v1262, 2147483648
    %v1267 = vmul.f32 %v1264, 1.442695
    %v1268 = vpow.pop %v1267
    %v1269 = vmul.f32 %v1265, 1.442695
    %v1270 = vpow.pop %v1269
    %v1271 = vmul.f32 %v1266, 1.442695
    %v1272 = vpow.pop %v1271
    %v1273 = vadd.f32 %v1268, 1.0
    %v1274 = vadd.f32 %v1270, 1.0
    %v1275 = vadd.f32 %v1272, 1.0
    %v1276 = vrcp.pop %v1273
    %v1277 = vmul.f32 1.0, %v1276
    %v1278 = vrcp.pop %v1274
    %v1279 = vmul.f32 1.0, %v1278
    %v1280 = vrcp.pop %v1275
    %v1281 = vmul.f32 1.0, %v1280
    %v1282 = vtanh.pop %v1263
    %v1283 = vmul.f32 %v1279, %v1111
    %v1284 = vmul.f32 %v1277, %v1282
    %v1285 = vadd.f32 %v1283, %v1284
    %v1286 = vtanh.pop %v1285
    %v1287 = vmul.f32 %v1281, %v1286
    %v1288 = vld [vmem:[#allocation2 + $0x60] sm:$0xff]
    %v1289 = vld [vmem:[#allocation2 + $0x68] sm:$0xff]
    %v1290 = vld [vmem:[#allocation2 + $0x70] sm:$0xff]
    %v1291 = vld [vmem:[#allocation2 + $0x78] sm:$0xff]
    %1292 = vmatprep.subr.mxu0 %v707
    %1293 = vmatpush1.msra.mxu0 %v706
    %1294 = vmatprep.subr.mxu0 %v711
    %1295 = vmatpush1.msra.mxu0 %v710
    %1296 = vmatprep.subr.mxu0 %v715
    %1297 = vmatpush1.msra.mxu0 %v714
    %1298 = vmatprep.subr.mxu0 %v719
    %1299 = vmatpush1.msra.mxu0 %v718
    %1300 = vmatprep.subr.mxu0 %v723
    %1301 = vmatpush1.msra.mxu0 %v722
    %1302 = vmatprep.subr.mxu0 %v727
    %1303 = vmatpush1.msra.mxu0 %v726
    %1304 = vmatprep.subr.mxu0 %v731
    %1305 = vmatpush1.msra.mxu0 %v730
    %1306 = vmatprep.subr.mxu0 %v735
    %1307 = vmatpush1.msra.mxu0 %v734
    %1308 = vmatprep.subr.mxu0 %v739
    %1309 = vmatpush1.msra.mxu0 %v738
    %1310 = vmatprep.subr.mxu0 %v743
    %1311 = vmatpush1.msra.mxu0 %v742
    %1312 = vmatprep.subr.mxu0 %v747
    %1313 = vmatpush1.msra.mxu0 %v746
    %1314 = vmatprep.subr.mxu0 %v751
    %1315 = vmatpush1.msra.mxu0 %v750
    %1316 = vmatprep.subr.mxu0 %v755
    %1317 = vmatpush1.msra.mxu0 %v754
    %1318 = vmatprep.subr.mxu0 %v759
    %1319 = vmatpush1.msra.mxu0 %v758
    %1320 = vmatprep.subr.mxu0 %v763
    %1321 = vmatpush1.msra.mxu0 %v762
    %1322 = vmatprep.subr.mxu0 %v767
    %1323 = vmatpush1.msra.mxu0 %v766
    %1324 = vmatprep.subr.mxu0 0.0
    %1325 = vmatpush1.msra.mxu0 0.0
    %1326 = vmatprep.subr.mxu0 0.0
    %1327 = vmatpush1.msra.mxu0 0.0
    %1328 = vmatprep.subr.mxu0 0.0
    %1329 = vmatpush1.msra.mxu0 0.0
    %1330 = vmatprep.subr.mxu0 0.0
    %1331 = vmatpush1.msra.mxu0 0.0
    %1332 = vmatprep.subr.mxu0 0.0
    %1333 = vmatpush1.msra.mxu0 0.0
    %1334 = vmatprep.subr.mxu0 0.0
    %1335 = vmatpush1.msra.mxu0 0.0
    %1336 = vmatprep.subr.mxu0 0.0
    %1337 = vmatpush1.msra.mxu0 0.0
    %1338 = vmatprep.subr.mxu0 0.0
    %1339 = vmatpush1.msra.mxu0 0.0
    %1340 = vmatprep.subr.mxu0 0.0
    %1341 = vmatpush1.msra.mxu0 0.0
    %1342 = vmatprep.subr.mxu0 0.0
    %1343 = vmatpush1.msra.mxu0 0.0
    %1344 = vmatprep.subr.mxu0 0.0
    %1345 = vmatpush1.msra.mxu0 0.0
    %1346 = vmatprep.subr.mxu0 0.0
    %1347 = vmatpush1.msra.mxu0 0.0
    %1348 = vmatprep.subr.mxu0 0.0
    %1349 = vmatpush1.msra.mxu0 0.0
    %1350 = vmatprep.subr.mxu0 0.0
    %1351 = vmatpush1.msra.mxu0 0.0
    %1352 = vmatprep.subr.mxu0 0.0
    %1353 = vmatpush1.msra.mxu0 0.0
    %1354 = vmatprep.subr.mxu0 0.0
    %1355 = vmatpush1.msra.mxu0 0.0
    %1356 = vmatprep.mubr.f32.mxu0 0.0
    %1357 = vmatmul.mubr.f32.gmra.mrb[0].mxu0 %v1287
    %v1358 = vpop.f32.mrb[0].mxu0
    %v1359 = vadd.f32 0.0, %v1358
    %v1360 = vpop.f32.mrb[0].mxu0
    %v1361 = vadd.f32 0.0, %v1360
    %1362 = vdwg.mxu0
    %1363 = vmatprep.subr.mxu0 %v709
    %1364 = vmatpush1.msra.mxu0 %v708
    %1365 = vmatprep.subr.mxu0 %v713
    %1366 = vmatpush1.msra.mxu0 %v712
    %1367 = vmatprep.subr.mxu0 %v717
    %1368 = vmatpush1.msra.mxu0 %v716
    %1369 = vmatprep.subr.mxu0 %v721
    %1370 = vmatpush1.msra.mxu0 %v720
    %1371 = vmatprep.subr.mxu0 %v725
    %1372 = vmatpush1.msra.mxu0 %v724
    %1373 = vmatprep.subr.mxu0 %v729
    %1374 = vmatpush1.msra.mxu0 %v728
    %1375 = vmatprep.subr.mxu0 %v733
    %1376 = vmatpush1.msra.mxu0 %v732
    %1377 = vmatprep.subr.mxu0 %v737
    %1378 = vmatpush1.msra.mxu0 %v736
    %1379 = vmatprep.subr.mxu0 %v741
    %1380 = vmatpush1.msra.mxu0 %v740
    %1381 = vmatprep.subr.mxu0 %v745
    %1382 = vmatpush1.msra.mxu0 %v744
    %1383 = vmatprep.subr.mxu0 %v749
    %1384 = vmatpush1.msra.mxu0 %v748
    %1385 = vmatprep.subr.mxu0 %v753
    %1386 = vmatpush1.msra.mxu0 %v752
    %1387 = vmatprep.subr.mxu0 %v757
    %1388 = vmatpush1.msra.mxu0 %v756
    %1389 = vmatprep.subr.mxu0 %v761
    %1390 = vmatpush1.msra.mxu0 %v760
    %1391 = vmatprep.subr.mxu0 %v765
    %1392 = vmatpush1.msra.mxu0 %v764
    %1393 = vmatprep.subr.mxu0 %v769
    %1394 = vmatpush1.msra.mxu0 %v768
    %1395 = vmatprep.subr.mxu0 0.0
    %1396 = vmatpush1.msra.mxu0 0.0
    %1397 = vmatprep.subr.mxu0 0.0
    %1398 = vmatpush1.msra.mxu0 0.0
    %1399 = vmatprep.subr.mxu0 0.0
    %1400 = vmatpush1.msra.mxu0 0.0
    %1401 = vmatprep.subr.mxu0 0.0
    %1402 = vmatpush1.msra.mxu0 0.0
    %1403 = vmatprep.subr.mxu0 0.0
    %1404 = vmatpush1.msra.mxu0 0.0
    %1405 = vmatprep.subr.mxu0 0.0
    %1406 = vmatpush1.msra.mxu0 0.0
    %1407 = vmatprep.subr.mxu0 0.0
    %1408 = vmatpush1.msra.mxu0 0.0
    %1409 = vmatprep.subr.mxu0 0.0
    %1410 = vmatpush1.msra.mxu0 0.0
    %1411 = vmatprep.subr.mxu0 0.0
    %1412 = vmatpush1.msra.mxu0 0.0
    %1413 = vmatprep.subr.mxu0 0.0
    %1414 = vmatpush1.msra.mxu0 0.0
    %1415 = vmatprep.subr.mxu0 0.0
    %1416 = vmatpush1.msra.mxu0 0.0
    %1417 = vmatprep.subr.mxu0 0.0
    %1418 = vmatpush1.msra.mxu0 0.0
    %1419 = vmatprep.subr.mxu0 0.0
    %1420 = vmatpush1.msra.mxu0 0.0
    %1421 = vmatprep.subr.mxu0 0.0
    %1422 = vmatpush1.msra.mxu0 0.0
    %1423 = vmatprep.subr.mxu0 0.0
    %1424 = vmatpush1.msra.mxu0 0.0
    %1425 = vmatprep.subr.mxu0 0.0
    %1426 = vmatpush1.msra.mxu0 0.0
    %1427 = vmatprep.mubr.f32.mxu0 0.0
    %1428 = vmatmul.mubr.f32.gmra.mrb[0].mxu0 %v1287
    %v1429 = vpop.f32.mrb[0].mxu0
    %v1430 = vadd.f32 0.0, %v1429
    %v1431 = vpop.f32.mrb[0].mxu0
    %v1432 = vadd.f32 0.0, %v1431
    %1433 = vdwg.mxu0
    %v1434 = vadd.f32 %v1288, %v1359
    %v1435 = vadd.f32 %v1289, %v1361
    %v1436 = vadd.f32 %v1290, %v1430
    %v1437 = vadd.f32 %v1291, %v1432
    %v1438 = vxor.u32 %v1434, 2147483648
    %v1439 = vxor.u32 %v1435, 2147483648
    %v1440 = vxor.u32 %v1436, 2147483648
    %v1441 = vmul.f32 %v1438, 1.442695
    %v1442 = vpow.pop %v1441
    %v1443 = vmul.f32 %v1439, 1.442695
    %v1444 = vpow.pop %v1443
    %v1445 = vmul.f32 %v1440, 1.442695
    %v1446 = vpow.pop %v1445
    %v1447 = vadd.f32 %v1442, 1.0
    %v1448 = vadd.f32 %v1444, 1.0
    %v1449 = vadd.f32 %v1446, 1.0
    %v1450 = vrcp.pop %v1447
    %v1451 = vmul.f32 1.0, %v1450
    %v1452 = vrcp.pop %v1448
    %v1453 = vmul.f32 1.0, %v1452
    %v1454 = vrcp.pop %v1449
    %v1455 = vmul.f32 1.0, %v1454
    %v1456 = vtanh.pop %v1437
    %v1457 = vmul.f32 %v1453, %v1285
    %v1458 = vmul.f32 %v1451, %v1456
    %v1459 = vadd.f32 %v1457, %v1458
    %v1460 = vtanh.pop %v1459
    %v1461 = vmul.f32 %v1455, %v1460
    %v1462 = vld [vmem:[#allocation2 + $0x80] sm:$0xff]
    %v1463 = vld [vmem:[#allocation2 + $0x88] sm:$0xff]
    %v1464 = vld [vmem:[#allocation2 + $0x90] sm:$0xff]
    %v1465 = vld [vmem:[#allocation2 + $0x98] sm:$0xff]
    %1466 = vmatprep.subr.mxu0 %v707
    %1467 = vmatpush1.msra.mxu0 %v706
    %1468 = vmatprep.subr.mxu0 %v711
    %1469 = vmatpush1.msra.mxu0 %v710
    %1470 = vmatprep.subr.mxu0 %v715
    %1471 = vmatpush1.msra.mxu0 %v714
    %1472 = vmatprep.subr.mxu0 %v719
    %1473 = vmatpush1.msra.mxu0 %v718
    %1474 = vmatprep.subr.mxu0 %v723
    %1475 = vmatpush1.msra.mxu0 %v722
    %1476 = vmatprep.subr.mxu0 %v727
    %1477 = vmatpush1.msra.mxu0 %v726
    %1478 = vmatprep.subr.mxu0 %v731
    %1479 = vmatpush1.msra.mxu0 %v730
    %1480 = vmatprep.subr.mxu0 %v735
    %1481 = vmatpush1.msra.mxu0 %v734
    %1482 = vmatprep.subr.mxu0 %v739
    %1483 = vmatpush1.msra.mxu0 %v738
    %1484 = vmatprep.subr.mxu0 %v743
    %1485 = vmatpush1.msra.mxu0 %v742
    %1486 = vmatprep.subr.mxu0 %v747
    %1487 = vmatpush1.msra.mxu0 %v746
    %1488 = vmatprep.subr.mxu0 %v751
    %1489 = vmatpush1.msra.mxu0 %v750
    %1490 = vmatprep.subr.mxu0 %v755
    %1491 = vmatpush1.msra.mxu0 %v754
    %1492 = vmatprep.subr.mxu0 %v759
    %1493 = vmatpush1.msra.mxu0 %v758
    %1494 = vmatprep.subr.mxu0 %v763
    %1495 = vmatpush1.msra.mxu0 %v762
    %1496 = vmatprep.subr.mxu0 %v767
    %1497 = vmatpush1.msra.mxu0 %v766
    %1498 = vmatprep.subr.mxu0 0.0
    %1499 = vmatpush1.msra.mxu0 0.0
    %1500 = vmatprep.subr.mxu0 0.0
    %1501 = vmatpush1.msra.mxu0 0.0
    %1502 = vmatprep.subr.mxu0 0.0
    %1503 = vmatpush1.msra.mxu0 0.0
    %1504 = vmatprep.subr.mxu0 0.0
    %1505 = vmatpush1.msra.mxu0 0.0
    %1506 = vmatprep.subr.mxu0 0.0
    %1507 = vmatpush1.msra.mxu0 0.0
    %1508 = vmatprep.subr.mxu0 0.0
    %1509 = vmatpush1.msra.mxu0 0.0
    %1510 = vmatprep.subr.mxu0 0.0
    %1511 = vmatpush1.msra.mxu0 0.0
    %1512 = vmatprep.subr.mxu0 0.0
    %1513 = vmatpush1.msra.mxu0 0.0
    %1514 = vmatprep.subr.mxu0 0.0
    %1515 = vmatpush1.msra.mxu0 0.0
    %1516 = vmatprep.subr.mxu0 0.0
    %1517 = vmatpush1.msra.mxu0 0.0
    %1518 = vmatprep.subr.mxu0 0.0
    %1519 = vmatpush1.msra.mxu0 0.0
    %1520 = vmatprep.subr.mxu0 0.0
    %1521 = vmatpush1.msra.mxu0 0.0
    %1522 = vmatprep.subr.mxu0 0.0
    %1523 = vmatpush1.msra.mxu0 0.0
    %1524 = vmatprep.subr.mxu0 0.0
    %1525 = vmatpush1.msra.mxu0 0.0
    %1526 = vmatprep.subr.mxu0 0.0
    %1527 = vmatpush1.msra.mxu0 0.0
    %1528 = vmatprep.subr.mxu0 0.0
    %1529 = vmatpush1.msra.mxu0 0.0
    %1530 = vmatprep.mubr.f32.mxu0 0.0
    %1531 = vmatmul.mubr.f32.gmra.mrb[0].mxu0 %v1461
    %v1532 = vpop.f32.mrb[0].mxu0
    %v1533 = vadd.f32 0.0, %v1532
    %v1534 = vpop.f32.mrb[0].mxu0
    %v1535 = vadd.f32 0.0, %v1534
    %1536 = vdwg.mxu0
    %1537 = vmatprep.subr.mxu0 %v709
    %1538 = vmatpush1.msra.mxu0 %v708
    %1539 = vmatprep.subr.mxu0 %v713
    %1540 = vmatpush1.msra.mxu0 %v712
    %1541 = vmatprep.subr.mxu0 %v717
    %1542 = vmatpush1.msra.mxu0 %v716
    %1543 = vmatprep.subr.mxu0 %v721
    %1544 = vmatpush1.msra.mxu0 %v720
    %1545 = vmatprep.subr.mxu0 %v725
    %1546 = vmatpush1.msra.mxu0 %v724
    %1547 = vmatprep.subr.mxu0 %v729
    %1548 = vmatpush1.msra.mxu0 %v728
    %1549 = vmatprep.subr.mxu0 %v733
    %1550 = vmatpush1.msra.mxu0 %v732
    %1551 = vmatprep.subr.mxu0 %v737
    %1552 = vmatpush1.msra.mxu0 %v736
    %1553 = vmatprep.subr.mxu0 %v741
    %1554 = vmatpush1.msra.mxu0 %v740
    %1555 = vmatprep.subr.mxu0 %v745
    %1556 = vmatpush1.msra.mxu0 %v744
    %1557 = vmatprep.subr.mxu0 %v749
    %1558 = vmatpush1.msra.mxu0 %v748
    %1559 = vmatprep.subr.mxu0 %v753
    %1560 = vmatpush1.msra.mxu0 %v752
    %1561 = vmatprep.subr.mxu0 %v757
    %1562 = vmatpush1.msra.mxu0 %v756
    %1563 = vmatprep.subr.mxu0 %v761
    %1564 = vmatpush1.msra.mxu0 %v760
    %1565 = vmatprep.subr.mxu0 %v765
    %1566 = vmatpush1.msra.mxu0 %v764
    %1567 = vmatprep.subr.mxu0 %v769
    %1568 = vmatpush1.msra.mxu0 %v768
    %1569 = vmatprep.subr.mxu0 0.0
    %1570 = vmatpush1.msra.mxu0 0.0
    %1571 = vmatprep.subr.mxu0 0.0
    %1572 = vmatpush1.msra.mxu0 0.0
    %1573 = vmatprep.subr.mxu0 0.0
    %1574 = vmatpush1.msra.mxu0 0.0
    %1575 = vmatprep.subr.mxu0 0.0
    %1576 = vmatpush1.msra.mxu0 0.0
    %1577 = vmatprep.subr.mxu0 0.0
    %1578 = vmatpush1.msra.mxu0 0.0
    %1579 = vmatprep.subr.mxu0 0.0
    %1580 = vmatpush1.msra.mxu0 0.0
    %1581 = vmatprep.subr.mxu0 0.0
    %1582 = vmatpush1.msra.mxu0 0.0
    %1583 = vmatprep.subr.mxu0 0.0
    %1584 = vmatpush1.msra.mxu0 0.0
    %1585 = vmatprep.subr.mxu0 0.0
    %1586 = vmatpush1.msra.mxu0 0.0
    %1587 = vmatprep.subr.mxu0 0.0
    %1588 = vmatpush1.msra.mxu0 0.0
    %1589 = vmatprep.subr.mxu0 0.0
    %1590 = vmatpush1.msra.mxu0 0.0
    %1591 = vmatprep.subr.mxu0 0.0
    %1592 = vmatpush1.msra.mxu0 0.0
    %1593 = vmatprep.subr.mxu0 0.0
    %1594 = vmatpush1.msra.mxu0 0.0
    %1595 = vmatprep.subr.mxu0 0.0
    %1596 = vmatpush1.msra.mxu0 0.0
    %1597 = vmatprep.subr.mxu0 0.0
    %1598 = vmatpush1.msra.mxu0 0.0
    %1599 = vmatprep.subr.mxu0 0.0
    %1600 = vmatpush1.msra.mxu0 0.0
    %1601 = vmatprep.mubr.f32.mxu0 0.0
    %1602 = vmatmul.mubr.f32.gmra.mrb[0].mxu0 %v1461
    %v1603 = vpop.f32.mrb[0].mxu0
    %v1604 = vadd.f32 0.0, %v1603
    %v1605 = vpop.f32.mrb[0].mxu0
    %v1606 = vadd.f32 0.0, %v1605
    %1607 = vdwg.mxu0
    %v1608 = vadd.f32 %v1462, %v1533
    %v1609 = vadd.f32 %v1463, %v1535
    %v1610 = vadd.f32 %v1464, %v1604
    %v1611 = vadd.f32 %v1465, %v1606
    %v1612 = vxor.u32 %v1608, 2147483648
    %v1613 = vxor.u32 %v1609, 2147483648
    %v1614 = vxor.u32 %v1610, 2147483648
    %v1615 = vmul.f32 %v1612, 1.442695
    %v1616 = vpow.pop %v1615
    %v1617 = vmul.f32 %v1613, 1.442695
    %v1618 = vpow.pop %v1617
    %v1619 = vmul.f32 %v1614, 1.442695
    %v1620 = vpow.pop %v1619
    %v1621 = vadd.f32 %v1616, 1.0
    %v1622 = vadd.f32 %v1618, 1.0
    %v1623 = vadd.f32 %v1620, 1.0
    %v1624 = vrcp.pop %v1621
    %v1625 = vmul.f32 1.0, %v1624
    %v1626 = vrcp.pop %v1622
    %v1627 = vmul.f32 1.0, %v1626
    %v1628 = vrcp.pop %v1623
    %v1629 = vmul.f32 1.0, %v1628
    %v1630 = vtanh.pop %v1611
    %v1631 = vmul.f32 %v1627, %v1459
    %v1632 = vmul.f32 %v1625, %v1630
    %v1633 = vadd.f32 %v1631, %v1632
    %v1634 = vtanh.pop %v1633
    %v1635 = vmul.f32 %v1629, %v1634
    %v1636 = vld [vmem:[#allocation2 + $0xa0] sm:$0xff]
    %v1637 = vld [vmem:[#allocation2 + $0xa8] sm:$0xff]
    %v1638 = vld [vmem:[#allocation2 + $0xb0] sm:$0xff]
    %v1639 = vld [vmem:[#allocation2 + $0xb8] sm:$0xff]
    %1640 = vmatprep.subr.mxu0 %v707
    %1641 = vmatpush1.msra.mxu0 %v706
    %1642 = vmatprep.subr.mxu0 %v711
    %1643 = vmatpush1.msra.mxu0 %v710
    %1644 = vmatprep.subr.mxu0 %v715
    %1645 = vmatpush1.msra.mxu0 %v714
    %1646 = vmatprep.subr.mxu0 %v719
    %1647 = vmatpush1.msra.mxu0 %v718
    %1648 = vmatprep.subr.mxu0 %v723
    %1649 = vmatpush1.msra.mxu0 %v722
    %1650 = vmatprep.subr.mxu0 %v727
    %1651 = vmatpush1.msra.mxu0 %v726
    %1652 = vmatprep.subr.mxu0 %v731
    %1653 = vmatpush1.msra.mxu0 %v730
    %1654 = vmatprep.subr.mxu0 %v735
    %1655 = vmatpush1.msra.mxu0 %v734
    %1656 = vmatprep.subr.mxu0 %v739
    %1657 = vmatpush1.msra.mxu0 %v738
    %1658 = vmatprep.subr.mxu0 %v743
    %1659 = vmatpush1.msra.mxu0 %v742
    %1660 = vmatprep.subr.mxu0 %v747
    %1661 = vmatpush1.msra.mxu0 %v746
    %1662 = vmatprep.subr.mxu0 %v751
    %1663 = vmatpush1.msra.mxu0 %v750
    %1664 = vmatprep.subr.mxu0 %v755
    %1665 = vmatpush1.msra.mxu0 %v754
    %1666 = vmatprep.subr.mxu0 %v759
    %1667 = vmatpush1.msra.mxu0 %v758
    %1668 = vmatprep.subr.mxu0 %v763
    %1669 = vmatpush1.msra.mxu0 %v762
    %1670 = vmatprep.subr.mxu0 %v767
    %1671 = vmatpush1.msra.mxu0 %v766
    %1672 = vmatprep.subr.mxu0 0.0
    %1673 = vmatpush1.msra.mxu0 0.0
    %1674 = vmatprep.subr.mxu0 0.0
    %1675 = vmatpush1.msra.mxu0 0.0
    %1676 = vmatprep.subr.mxu0 0.0
    %1677 = vmatpush1.msra.mxu0 0.0
    %1678 = vmatprep.subr.mxu0 0.0
    %1679 = vmatpush1.msra.mxu0 0.0
    %1680 = vmatprep.subr.mxu0 0.0
    %1681 = vmatpush1.msra.mxu0 0.0
    %1682 = vmatprep.subr.mxu0 0.0
    %1683 = vmatpush1.msra.mxu0 0.0
    %1684 = vmatprep.subr.mxu0 0.0
    %1685 = vmatpush1.msra.mxu0 0.0
    %1686 = vmatprep.subr.mxu0 0.0
    %1687 = vmatpush1.msra.mxu0 0.0
    %1688 = vmatprep.subr.mxu0 0.0
    %1689 = vmatpush1.msra.mxu0 0.0
    %1690 = vmatprep.subr.mxu0 0.0
    %1691 = vmatpush1.msra.mxu0 0.0
    %1692 = vmatprep.subr.mxu0 0.0
    %1693 = vmatpush1.msra.mxu0 0.0
    %1694 = vmatprep.subr.mxu0 0.0
    %1695 = vmatpush1.msra.mxu0 0.0
    %1696 = vmatprep.subr.mxu0 0.0
    %1697 = vmatpush1.msra.mxu0 0.0
    %1698 = vmatprep.subr.mxu0 0.0
    %1699 = vmatpush1.msra.mxu0 0.0
    %1700 = vmatprep.subr.mxu0 0.0
    %1701 = vmatpush1.msra.mxu0 0.0
    %1702 = vmatprep.subr.mxu0 0.0
    %1703 = vmatpush1.msra.mxu0 0.0
    %1704 = vmatprep.mubr.f32.mxu0 0.0
    %1705 = vmatmul.mubr.f32.gmra.mrb[0].mxu0 %v1635
    %v1706 = vpop.f32.mrb[0].mxu0
    %v1707 = vadd.f32 0.0, %v1706
    %v1708 = vpop.f32.mrb[0].mxu0
    %v1709 = vadd.f32 0.0, %v1708
    %1710 = vdwg.mxu0
    %1711 = vmatprep.subr.mxu0 %v709
    %1712 = vmatpush1.msra.mxu0 %v708
    %1713 = vmatprep.subr.mxu0 %v713
    %1714 = vmatpush1.msra.mxu0 %v712
    %1715 = vmatprep.subr.mxu0 %v717
    %1716 = vmatpush1.msra.mxu0 %v716
    %1717 = vmatprep.subr.mxu0 %v721
    %1718 = vmatpush1.msra.mxu0 %v720
    %1719 = vmatprep.subr.mxu0 %v725
    %1720 = vmatpush1.msra.mxu0 %v724
    %1721 = vmatprep.subr.mxu0 %v729
    %1722 = vmatpush1.msra.mxu0 %v728
    %1723 = vmatprep.subr.mxu0 %v733
    %1724 = vmatpush1.msra.mxu0 %v732
    %1725 = vmatprep.subr.mxu0 %v737
    %1726 = vmatpush1.msra.mxu0 %v736
    %1727 = vmatprep.subr.mxu0 %v741
    %1728 = vmatpush1.msra.mxu0 %v740
    %1729 = vmatprep.subr.mxu0 %v745
    %1730 = vmatpush1.msra.mxu0 %v744
    %1731 = vmatprep.subr.mxu0 %v749
    %1732 = vmatpush1.msra.mxu0 %v748
    %1733 = vmatprep.subr.mxu0 %v753
    %1734 = vmatpush1.msra.mxu0 %v752
    %1735 = vmatprep.subr.mxu0 %v757
    %1736 = vmatpush1.msra.mxu0 %v756
    %1737 = vmatprep.subr.mxu0 %v761
    %1738 = vmatpush1.msra.mxu0 %v760
    %1739 = vmatprep.subr.mxu0 %v765
    %1740 = vmatpush1.msra.mxu0 %v764
    %1741 = vmatprep.subr.mxu0 %v769
    %1742 = vmatpush1.msra.mxu0 %v768
    %1743 = vmatprep.subr.mxu0 0.0
    %1744 = vmatpush1.msra.mxu0 0.0
    %1745 = vmatprep.subr.mxu0 0.0
    %1746 = vmatpush1.msra.mxu0 0.0
    %1747 = vmatprep.subr.mxu0 0.0
    %1748 = vmatpush1.msra.mxu0 0.0
    %1749 = vmatprep.subr.mxu0 0.0
    %1750 = vmatpush1.msra.mxu0 0.0
    %1751 = vmatprep.subr.mxu0 0.0
    %1752 = vmatpush1.msra.mxu0 0.0
    %1753 = vmatprep.subr.mxu0 0.0
    %1754 = vmatpush1.msra.mxu0 0.0
    %1755 = vmatprep.subr.mxu0 0.0
    %1756 = vmatpush1.msra.mxu0 0.0
    %1757 = vmatprep.subr.mxu0 0.0
    %1758 = vmatpush1.msra.mxu0 0.0
    %1759 = vmatprep.subr.mxu0 0.0
    %1760 = vmatpush1.msra.mxu0 0.0
    %1761 = vmatprep.subr.mxu0 0.0
    %1762 = vmatpush1.msra.mxu0 0.0
    %1763 = vmatprep.subr.mxu0 0.0
    %1764 = vmatpush1.msra.mxu0 0.0
    %1765 = vmatprep.subr.mxu0 0.0
    %1766 = vmatpush1.msra.mxu0 0.0
    %1767 = vmatprep.subr.mxu0 0.0
    %1768 = vmatpush1.msra.mxu0 0.0
    %1769 = vmatprep.subr.mxu0 0.0
    %1770 = vmatpush1.msra.mxu0 0.0
    %1771 = vmatprep.subr.mxu0 0.0
    %1772 = vmatpush1.msra.mxu0 0.0
    %1773 = vmatprep.subr.mxu0 0.0
    %1774 = vmatpush1.msra.mxu0 0.0
    %1775 = vmatprep.mubr.f32.mxu0 0.0
    %1776 = vmatmul.mubr.f32.gmra.mrb[0].mxu0 %v1635
    %v1777 = vpop.f32.mrb[0].mxu0
    %v1778 = vadd.f32 0.0, %v1777
    %v1779 = vpop.f32.mrb[0].mxu0
    %v1780 = vadd.f32 0.0, %v1779
    %1781 = vdwg.mxu0
    %v1782 = vadd.f32 %v1636, %v1707
    %v1783 = vadd.f32 %v1637, %v1709
    %v1784 = vadd.f32 %v1638, %v1778
    %v1785 = vadd.f32 %v1639, %v1780
    %v1786 = vxor.u32 %v1782, 2147483648
    %v1787 = vxor.u32 %v1783, 2147483648
    %v1788 = vxor.u32 %v1784, 2147483648
    %v1789 = vmul.f32 %v1786, 1.442695
    %v1790 = vpow.pop %v1789
    %v1791 = vmul.f32 %v1787, 1.442695
    %v1792 = vpow.pop %v1791
    %v1793 = vmul.f32 %v1788, 1.442695
    %v1794 = vpow.pop %v1793
    %v1795 = vadd.f32 %v1790, 1.0
    %v1796 = vadd.f32 %v1792, 1.0
    %v1797 = vadd.f32 %v1794, 1.0
    %v1798 = vrcp.pop %v1795
    %v1799 = vmul.f32 1.0, %v1798
    %v1800 = vrcp.pop %v1796
    %v1801 = vmul.f32 1.0, %v1800
    %v1802 = vrcp.pop %v1797
    %v1803 = vmul.f32 1.0, %v1802
    %v1804 = vtanh.pop %v1785
    %v1805 = vmul.f32 %v1801, %v1633
    %v1806 = vmul.f32 %v1799, %v1804
    %v1807 = vadd.f32 %v1805, %v1806
    %v1808 = vtanh.pop %v1807
    %v1809 = vmul.f32 %v1803, %v1808
    %v1810 = vld [vmem:[#allocation2 + $0xc0] sm:$0xff]
    %v1811 = vld [vmem:[#allocation2 + $0xc8] sm:$0xff]
    %v1812 = vld [vmem:[#allocation2 + $0xd0] sm:$0xff]
    %v1813 = vld [vmem:[#allocation2 + $0xd8] sm:$0xff]
    %1814 = vmatprep.subr.mxu0 %v707
    %1815 = vmatpush1.msra.mxu0 %v706
    %1816 = vmatprep.subr.mxu0 %v711
    %1817 = vmatpush1.msra.mxu0 %v710
    %1818 = vmatprep.subr.mxu0 %v715
    %1819 = vmatpush1.msra.mxu0 %v714
    %1820 = vmatprep.subr.mxu0 %v719
    %1821 = vmatpush1.msra.mxu0 %v718
    %1822 = vmatprep.subr.mxu0 %v723
    %1823 = vmatpush1.msra.mxu0 %v722
    %1824 = vmatprep.subr.mxu0 %v727
    %1825 = vmatpush1.msra.mxu0 %v726
    %1826 = vmatprep.subr.mxu0 %v731
    %1827 = vmatpush1.msra.mxu0 %v730
    %1828 = vmatprep.subr.mxu0 %v735
    %1829 = vmatpush1.msra.mxu0 %v734
    %1830 = vmatprep.subr.mxu0 %v739
    %1831 = vmatpush1.msra.mxu0 %v738
    %1832 = vmatprep.subr.mxu0 %v743
    %1833 = vmatpush1.msra.mxu0 %v742
    %1834 = vmatprep.subr.mxu0 %v747
    %1835 = vmatpush1.msra.mxu0 %v746
    %1836 = vmatprep.subr.mxu0 %v751
    %1837 = vmatpush1.msra.mxu0 %v750
    %1838 = vmatprep.subr.mxu0 %v755
    %1839 = vmatpush1.msra.mxu0 %v754
    %1840 = vmatprep.subr.mxu0 %v759
    %1841 = vmatpush1.msra.mxu0 %v758
    %1842 = vmatprep.subr.mxu0 %v763
    %1843 = vmatpush1.msra.mxu0 %v762
    %1844 = vmatprep.subr.mxu0 %v767
    %1845 = vmatpush1.msra.mxu0 %v766
    %1846 = vmatprep.subr.mxu0 0.0
    %1847 = vmatpush1.msra.mxu0 0.0
    %1848 = vmatprep.subr.mxu0 0.0
    %1849 = vmatpush1.msra.mxu0 0.0
    %1850 = vmatprep.subr.mxu0 0.0
    %1851 = vmatpush1.msra.mxu0 0.0
    %1852 = vmatprep.subr.mxu0 0.0
    %1853 = vmatpush1.msra.mxu0 0.0
    %1854 = vmatprep.subr.mxu0 0.0
    %1855 = vmatpush1.msra.mxu0 0.0
    %1856 = vmatprep.subr.mxu0 0.0
    %1857 = vmatpush1.msra.mxu0 0.0
    %1858 = vmatprep.subr.mxu0 0.0
    %1859 = vmatpush1.msra.mxu0 0.0
    %1860 = vmatprep.subr.mxu0 0.0
    %1861 = vmatpush1.msra.mxu0 0.0
    %1862 = vmatprep.subr.mxu0 0.0
    %1863 = vmatpush1.msra.mxu0 0.0
    %1864 = vmatprep.subr.mxu0 0.0
    %1865 = vmatpush1.msra.mxu0 0.0
    %1866 = vmatprep.subr.mxu0 0.0
    %1867 = vmatpush1.msra.mxu0 0.0
    %1868 = vmatprep.subr.mxu0 0.0
    %1869 = vmatpush1.msra.mxu0 0.0
    %1870 = vmatprep.subr.mxu0 0.0
    %1871 = vmatpush1.msra.mxu0 0.0
    %1872 = vmatprep.subr.mxu0 0.0
    %1873 = vmatpush1.msra.mxu0 0.0
    %1874 = vmatprep.subr.mxu0 0.0
    %1875 = vmatpush1.msra.mxu0 0.0
    %1876 = vmatprep.subr.mxu0 0.0
    %1877 = vmatpush1.msra.mxu0 0.0
    %1878 = vmatprep.mubr.f32.mxu0 0.0
    %1879 = vmatmul.mubr.f32.gmra.mrb[0].mxu0 %v1809
    %v1880 = vpop.f32.mrb[0].mxu0
    %v1881 = vadd.f32 0.0, %v1880
    %v1882 = vpop.f32.mrb[0].mxu0
    %v1883 = vadd.f32 0.0, %v1882
    %1884 = vdwg.mxu0
    %1885 = vmatprep.subr.mxu0 %v709
    %1886 = vmatpush1.msra.mxu0 %v708
    %1887 = vmatprep.subr.mxu0 %v713
    %1888 = vmatpush1.msra.mxu0 %v712
    %1889 = vmatprep.subr.mxu0 %v717
    %1890 = vmatpush1.msra.mxu0 %v716
    %1891 = vmatprep.subr.mxu0 %v721
    %1892 = vmatpush1.msra.mxu0 %v720
    %1893 = vmatprep.subr.mxu0 %v725
    %1894 = vmatpush1.msra.mxu0 %v724
    %1895 = vmatprep.subr.mxu0 %v729
    %1896 = vmatpush1.msra.mxu0 %v728
    %1897 = vmatprep.subr.mxu0 %v733
    %1898 = vmatpush1.msra.mxu0 %v732
    %1899 = vmatprep.subr.mxu0 %v737
    %1900 = vmatpush1.msra.mxu0 %v736
    %1901 = vmatprep.subr.mxu0 %v741
    %1902 = vmatpush1.msra.mxu0 %v740
    %1903 = vmatprep.subr.mxu0 %v745
    %1904 = vmatpush1.msra.mxu0 %v744
    %1905 = vmatprep.subr.mxu0 %v749
    %1906 = vmatpush1.msra.mxu0 %v748
    %1907 = vmatprep.subr.mxu0 %v753
    %1908 = vmatpush1.msra.mxu0 %v752
    %1909 = vmatprep.subr.mxu0 %v757
    %1910 = vmatpush1.msra.mxu0 %v756
    %1911 = vmatprep.subr.mxu0 %v761
    %1912 = vmatpush1.msra.mxu0 %v760
    %1913 = vmatprep.subr.mxu0 %v765
    %1914 = vmatpush1.msra.mxu0 %v764
    %1915 = vmatprep.subr.mxu0 %v769
    %1916 = vmatpush1.msra.mxu0 %v768
    %1917 = vmatprep.subr.mxu0 0.0
    %1918 = vmatpush1.msra.mxu0 0.0
    %1919 = vmatprep.subr.mxu0 0.0
    %1920 = vmatpush1.msra.mxu0 0.0
    %1921 = vmatprep.subr.mxu0 0.0
    %1922 = vmatpush1.msra.mxu0 0.0
    %1923 = vmatprep.subr.mxu0 0.0
    %1924 = vmatpush1.msra.mxu0 0.0
    %1925 = vmatprep.subr.mxu0 0.0
    %1926 = vmatpush1.msra.mxu0 0.0
    %1927 = vmatprep.subr.mxu0 0.0
    %1928 = vmatpush1.msra.mxu0 0.0
    %1929 = vmatprep.subr.mxu0 0.0
    %1930 = vmatpush1.msra.mxu0 0.0
    %1931 = vmatprep.subr.mxu0 0.0
    %1932 = vmatpush1.msra.mxu0 0.0
    %1933 = vmatprep.subr.mxu0 0.0
    %1934 = vmatpush1.msra.mxu0 0.0
    %1935 = vmatprep.subr.mxu0 0.0
    %1936 = vmatpush1.msra.mxu0 0.0
    %1937 = vmatprep.subr.mxu0 0.0
    %1938 = vmatpush1.msra.mxu0 0.0
    %1939 = vmatprep.subr.mxu0 0.0
    %1940 = vmatpush1.msra.mxu0 0.0
    %1941 = vmatprep.subr.mxu0 0.0
    %1942 = vmatpush1.msra.mxu0 0.0
    %1943 = vmatprep.subr.mxu0 0.0
    %1944 = vmatpush1.msra.mxu0 0.0
    %1945 = vmatprep.subr.mxu0 0.0
    %1946 = vmatpush1.msra.mxu0 0.0
    %1947 = vmatprep.subr.mxu0 0.0
    %1948 = vmatpush1.msra.mxu0 0.0
    %1949 = vmatprep.mubr.f32.mxu0 0.0
    %1950 = vmatmul.mubr.f32.gmra.mrb[0].mxu0 %v1809
    %v1951 = vpop.f32.mrb[0].mxu0
    %v1952 = vadd.f32 0.0, %v1951
    %v1953 = vpop.f32.mrb[0].mxu0
    %v1954 = vadd.f32 0.0, %v1953
    %1955 = vdwg.mxu0
    %v1956 = vadd.f32 %v1810, %v1881
    %v1957 = vadd.f32 %v1811, %v1883
    %v1958 = vadd.f32 %v1812, %v1952
    %v1959 = vadd.f32 %v1813, %v1954
    %v1960 = vxor.u32 %v1956, 2147483648
    %v1961 = vxor.u32 %v1957, 2147483648
    %v1962 = vxor.u32 %v1958, 2147483648
    %v1963 = vmul.f32 %v1960, 1.442695
    %v1964 = vpow.pop %v1963
    %v1965 = vmul.f32 %v1961, 1.442695
    %v1966 = vpow.pop %v1965
    %v1967 = vmul.f32 %v1962, 1.442695
    %v1968 = vpow.pop %v1967
    %v1969 = vadd.f32 %v1964, 1.0
    %v1970 = vadd.f32 %v1966, 1.0
    %v1971 = vadd.f32 %v1968, 1.0
    %v1972 = vrcp.pop %v1969
    %v1973 = vmul.f32 1.0, %v1972
    %v1974 = vrcp.pop %v1970
    %v1975 = vmul.f32 1.0, %v1974
    %v1976 = vrcp.pop %v1971
    %v1977 = vmul.f32 1.0, %v1976
    %v1978 = vtanh.pop %v1959
    %v1979 = vmul.f32 %v1975, %v1807
    %v1980 = vmul.f32 %v1973, %v1978
    %v1981 = vadd.f32 %v1979, %v1980
    %v1982 = vtanh.pop %v1981
    %v1983 = vmul.f32 %v1977, %v1982
    %v1984 = vld [vmem:[#allocation2 + $0xe0] sm:$0xff]
    %v1985 = vld [vmem:[#allocation2 + $0xe8] sm:$0xff]
    %v1986 = vld [vmem:[#allocation2 + $0xf0] sm:$0xff]
    %v1987 = vld [vmem:[#allocation2 + $0xf8] sm:$0xff]
    %1988 = vmatprep.subr.mxu0 %v707
    %1989 = vmatpush1.msra.mxu0 %v706
    %1990 = vmatprep.subr.mxu0 %v711
    %1991 = vmatpush1.msra.mxu0 %v710
    %1992 = vmatprep.subr.mxu0 %v715
    %1993 = vmatpush1.msra.mxu0 %v714
    %1994 = vmatprep.subr.mxu0 %v719
    %1995 = vmatpush1.msra.mxu0 %v718
    %1996 = vmatprep.subr.mxu0 %v723
    %1997 = vmatpush1.msra.mxu0 %v722
    %1998 = vmatprep.subr.mxu0 %v727
    %1999 = vmatpush1.msra.mxu0 %v726
    %2000 = vmatprep.subr.mxu0 %v731
    %2001 = vmatpush1.msra.mxu0 %v730
    %2002 = vmatprep.subr.mxu0 %v735
    %2003 = vmatpush1.msra.mxu0 %v734
    %2004 = vmatprep.subr.mxu0 %v739
    %2005 = vmatpush1.msra.mxu0 %v738
    %2006 = vmatprep.subr.mxu0 %v743
    %2007 = vmatpush1.msra.mxu0 %v742
    %2008 = vmatprep.subr.mxu0 %v747
    %2009 = vmatpush1.msra.mxu0 %v746
    %2010 = vmatprep.subr.mxu0 %v751
    %2011 = vmatpush1.msra.mxu0 %v750
    %2012 = vmatprep.subr.mxu0 %v755
    %2013 = vmatpush1.msra.mxu0 %v754
    %2014 = vmatprep.subr.mxu0 %v759
    %2015 = vmatpush1.msra.mxu0 %v758
    %2016 = vmatprep.subr.mxu0 %v763
    %2017 = vmatpush1.msra.mxu0 %v762
    %2018 = vmatprep.subr.mxu0 %v767
    %2019 = vmatpush1.msra.mxu0 %v766
    %2020 = vmatprep.subr.mxu0 0.0
    %2021 = vmatpush1.msra.mxu0 0.0
    %2022 = vmatprep.subr.mxu0 0.0
    %2023 = vmatpush1.msra.mxu0 0.0
    %2024 = vmatprep.subr.mxu0 0.0
    %2025 = vmatpush1.msra.mxu0 0.0
    %2026 = vmatprep.subr.mxu0 0.0
    %2027 = vmatpush1.msra.mxu0 0.0
    %2028 = vmatprep.subr.mxu0 0.0
    %2029 = vmatpush1.msra.mxu0 0.0
    %2030 = vmatprep.subr.mxu0 0.0
    %2031 = vmatpush1.msra.mxu0 0.0
    %2032 = vmatprep.subr.mxu0 0.0
    %2033 = vmatpush1.msra.mxu0 0.0
    %2034 = vmatprep.subr.mxu0 0.0
    %2035 = vmatpush1.msra.mxu0 0.0
    %2036 = vmatprep.subr.mxu0 0.0
    %2037 = vmatpush1.msra.mxu0 0.0
    %2038 = vmatprep.subr.mxu0 0.0
    %2039 = vmatpush1.msra.mxu0 0.0
    %2040 = vmatprep.subr.mxu0 0.0
    %2041 = vmatpush1.msra.mxu0 0.0
    %2042 = vmatprep.subr.mxu0 0.0
    %2043 = vmatpush1.msra.mxu0 0.0
    %2044 = vmatprep.subr.mxu0 0.0
    %2045 = vmatpush1.msra.mxu0 0.0
    %2046 = vmatprep.subr.mxu0 0.0
    %2047 = vmatpush1.msra.mxu0 0.0
    %2048 = vmatprep.subr.mxu0 0.0
    %2049 = vmatpush1.msra.mxu0 0.0
    %2050 = vmatprep.subr.mxu0 0.0
    %2051 = vmatpush1.msra.mxu0 0.0
    %2052 = vmatprep.mubr.f32.mxu0 0.0
    %2053 = vmatmul.mubr.f32.gmra.mrb[0].mxu0 %v1983
    %v2054 = vpop.f32.mrb[0].mxu0
    %v2055 = vadd.f32 0.0, %v2054
    %v2056 = vpop.f32.mrb[0].mxu0
    %v2057 = vadd.f32 0.0, %v2056
    %2058 = vdwg.mxu0
    %2059 = vmatprep.subr.mxu0 %v709
    %2060 = vmatpush1.msra.mxu0 %v708
    %2061 = vmatprep.subr.mxu0 %v713
    %2062 = vmatpush1.msra.mxu0 %v712
    %2063 = vmatprep.subr.mxu0 %v717
    %2064 = vmatpush1.msra.mxu0 %v716
    %2065 = vmatprep.subr.mxu0 %v721
    %2066 = vmatpush1.msra.mxu0 %v720
    %2067 = vmatprep.subr.mxu0 %v725
    %2068 = vmatpush1.msra.mxu0 %v724
    %2069 = vmatprep.subr.mxu0 %v729
    %2070 = vmatpush1.msra.mxu0 %v728
    %2071 = vmatprep.subr.mxu0 %v733
    %2072 = vmatpush1.msra.mxu0 %v732
    %2073 = vmatprep.subr.mxu0 %v737
    %2074 = vmatpush1.msra.mxu0 %v736
    %2075 = vmatprep.subr.mxu0 %v741
    %2076 = vmatpush1.msra.mxu0 %v740
    %2077 = vmatprep.subr.mxu0 %v745
    %2078 = vmatpush1.msra.mxu0 %v744
    %2079 = vmatprep.subr.mxu0 %v749
    %2080 = vmatpush1.msra.mxu0 %v748
    %2081 = vmatprep.subr.mxu0 %v753
    %2082 = vmatpush1.msra.mxu0 %v752
    %2083 = vmatprep.subr.mxu0 %v757
    %2084 = vmatpush1.msra.mxu0 %v756
    %2085 = vmatprep.subr.mxu0 %v761
    %2086 = vmatpush1.msra.mxu0 %v760
    %2087 = vmatprep.subr.mxu0 %v765
    %2088 = vmatpush1.msra.mxu0 %v764
    %2089 = vmatprep.subr.mxu0 %v769
    %2090 = vmatpush1.msra.mxu0 %v768
    %2091 = vmatprep.subr.mxu0 0.0
    %2092 = vmatpush1.msra.mxu0 0.0
    %2093 = vmatprep.subr.mxu0 0.0
    %2094 = vmatpush1.msra.mxu0 0.0
    %2095 = vmatprep.subr.mxu0 0.0
    %2096 = vmatpush1.msra.mxu0 0.0
    %2097 = vmatprep.subr.mxu0 0.0
    %2098 = vmatpush1.msra.mxu0 0.0
    %2099 = vmatprep.subr.mxu0 0.0
    %2100 = vmatpush1.msra.mxu0 0.0
    %2101 = vmatprep.subr.mxu0 0.0
    %2102 = vmatpush1.msra.mxu0 0.0
    %2103 = vmatprep.subr.mxu0 0.0
    %2104 = vmatpush1.msra.mxu0 0.0
    %2105 = vmatprep.subr.mxu0 0.0
    %2106 = vmatpush1.msra.mxu0 0.0
    %2107 = vmatprep.subr.mxu0 0.0
    %2108 = vmatpush1.msra.mxu0 0.0
    %2109 = vmatprep.subr.mxu0 0.0
    %2110 = vmatpush1.msra.mxu0 0.0
    %2111 = vmatprep.subr.mxu0 0.0
    %2112 = vmatpush1.msra.mxu0 0.0
    %2113 = vmatprep.subr.mxu0 0.0
    %2114 = vmatpush1.msra.mxu0 0.0
    %2115 = vmatprep.subr.mxu0 0.0
    %2116 = vmatpush1.msra.mxu0 0.0
    %2117 = vmatprep.subr.mxu0 0.0
    %2118 = vmatpush1.msra.mxu0 0.0
    %2119 = vmatprep.subr.mxu0 0.0
    %2120 = vmatpush1.msra.mxu0 0.0
    %2121 = vmatprep.subr.mxu0 0.0
    %2122 = vmatpush1.msra.mxu0 0.0
    %2123 = vmatprep.mubr.f32.mxu0 0.0
    %2124 = vmatmul.mubr.f32.gmra.mrb[0].mxu0 %v1983
    %v2125 = vpop.f32.mrb[0].mxu0
    %v2126 = vadd.f32 0.0, %v2125
    %v2127 = vpop.f32.mrb[0].mxu0
    %v2128 = vadd.f32 0.0, %v2127
    %2129 = vdwg.mxu0
    %v2130 = vadd.f32 %v1984, %v2055
    %v2131 = vadd.f32 %v1985, %v2057
    %v2132 = vadd.f32 %v1986, %v2126
    %v2133 = vadd.f32 %v1987, %v2128
    %v2134 = vxor.u32 %v2130, 2147483648
    %v2135 = vxor.u32 %v2131, 2147483648
    %v2136 = vxor.u32 %v2132, 2147483648
    %v2137 = vmul.f32 %v2134, 1.442695
    %v2138 = vpow.pop %v2137
    %v2139 = vmul.f32 %v2135, 1.442695
    %v2140 = vpow.pop %v2139
    %v2141 = vmul.f32 %v2136, 1.442695
    %v2142 = vpow.pop %v2141
    %v2143 = vadd.f32 %v2138, 1.0
    %v2144 = vadd.f32 %v2140, 1.0
    %v2145 = vadd.f32 %v2142, 1.0
    %v2146 = vrcp.pop %v2143
    %v2147 = vmul.f32 1.0, %v2146
    %v2148 = vrcp.pop %v2144
    %v2149 = vmul.f32 1.0, %v2148
    %v2150 = vrcp.pop %v2145
    %v2151 = vmul.f32 1.0, %v2150
    %v2152 = vtanh.pop %v2133
    %v2153 = vmul.f32 %v2149, %v1981
    %v2154 = vmul.f32 %v2147, %v2152
    %v2155 = vadd.f32 %v2153, %v2154
    %v2156 = vtanh.pop %v2155
    %v2157 = vmul.f32 %v2151, %v2156
    %2158 = vst [vmem:[#allocation6] sm:$0xff] %v2157
    // Predicated region
    $region38: #{tpu_custom_call.1} parent=1 // pred_check
      _
    $region39: #{tpu_custom_call.1} parent=1 // pred_check_branch
      %2160 = sbr.rel (0) target = $region41
    $region40: #{tpu_custom_call.1} parent=1 // pred_region
      %s2162 = ssub.s32 128, 128
      %2163 = vsyncadd [#allocation5], %s2162
      %s2165 = sshll.u32 [#allocation6], 4
      %s2166 = int_to_ptr.vmem [resolvable:$true] %s2165
      %2168 = dma.vmem_to_hbm [thread:$0]  %s2166, 128, %s8, [#allocation5]
    $region41: #{tpu_custom_call.1} parent=1 // pred_fallthru
      _
    // Predicated region
    $region42: #{tpu_custom_call.1} parent=1 // pred_check
      _
    $region43: #{tpu_custom_call.1} parent=1 // pred_check_branch
      %2170 = sbr.rel (0) target = $region45
    $region44: #{tpu_custom_call.1} parent=1 // pred_region
      %2171 = dma.done [#allocation5], 128
    $region45: #{tpu_custom_call.1} parent=1 // pred_fallthru
      _
    %2172 = vsyncpa [#allocation4], 1
    %2173 = vsyncpa [#allocation5], 1

</llo_original>
